<compile_context>
chip_gen: v7x
topology: tpu7x:2x2x1
jax: 0.10.0
libtpu: 0.0.40
codegen_flags: <defaults>
</compile_context>

<pallas_src>
import math
import jax
import jax.numpy as jnp
from jax.experimental import pallas as pl
from jax.experimental.pallas import tpu as pltpu


def graph_learning_kernel(x_ref, w_ref, a_ref):
    """One grid step == G graphs (all of them by default).

    x_ref: (G, N, F)  node features for the graphs of this step
    w_ref: (1, F)     shared learned weight
    a_ref: (G, N, N)  output adjacency (row-softmaxed), one slab per step
    """
    g, n, f = x_ref.shape
    w = w_ref[...].astype(jnp.float32)                     # (1, F)

    # Stream the pairwise score computation over i-row tiles so the live
    # abs-diff intermediate is O(ti * N * F), not O(N^2 * F).
    ti = 8 if (n % 8 == 0) else n
    n_tiles = n // ti

    # Hoist the weight broadcast to the multiply shape once (no CSE of
    # broadcast_in_dim inside the loops).
    w_b = jnp.broadcast_to(w[0][None, None, :], (ti, n, f))  # (ti, N, F)

    for b in range(g):                     # static loop over graphs in step
        x = x_ref[b].astype(jnp.float32)                   # (N, F)
        for t in range(n_tiles):           # static loop over i-row tiles
            xi = x[t * ti:(t + 1) * ti, :]                 # (ti, F)
            diff = jnp.abs(xi[:, None, :] - x[None, :, :])  # (ti, N, F)
            s = jnp.sum(diff * w_b, axis=-1)               # (ti, N)

            # s = exp(relu(score))  (matches the PyTorch reference; the
            # double exponential overflows f32 if the raw score exceeds ~88,
            # exactly as the reference does).
            s = jnp.exp(jnp.maximum(s, 0.0))

            # Row-wise softmax (dim=1) for this tile's rows, numerically
            # stable, exact division for bit-faithful agreement.
            m = jnp.max(s, axis=1, keepdims=True)
            e = jnp.exp(s - m)
            denom = jnp.sum(e, axis=1, keepdims=True)
            a_ref[b, t * ti:(t + 1) * ti, :] = e / denom


def graph_learning_batched(xs, weight, *, steps=1):
    """xs: (B, N, F) f32, weight: (1, F) f32 -> (A, D), each (B, N, N).

    steps=1 (default): a single grid step holds all B graphs — best on
    v5e/v6e (one TensorCore; the grid is a serial loop).
    steps=2: B/2 graphs per step, sharded across v7x's two TensorCores via
    dimension_semantics=("parallel",).
    """
    b, n, f = xs.shape
    assert b % steps == 0, "steps must divide the batch"
    g = b // steps

    A = pl.pallas_call(
        graph_learning_kernel,
        out_shape=jax.ShapeDtypeStruct((b, n, n), jnp.float32),
        grid=(steps,),
        in_specs=[
            pl.BlockSpec((g, n, f), lambda i: (i, 0, 0)),
            pl.BlockSpec((1, f), lambda i: (0, 0)),
        ],
        out_specs=pl.BlockSpec((g, n, n), lambda i: (i, 0, 0)),
        compiler_params=pltpu.CompilerParams(
            dimension_semantics=("parallel",),
        ),
    )(xs, weight)

    # D[b] = diag(sum(A[b], axis=1)) — tiny reduction + broadcast done in
    # plain JAX; avoids a lane-1 output stream and a dense near-identity
    # writeback from the kernel.
    row_sum = jnp.sum(A, axis=-1, keepdims=True)            # (B, N, 1)
    D = row_sum * jnp.eye(n, dtype=jnp.float32)             # (B, N, N)
    return A, D


def graph_learning(x, weight):
    """Single-graph API matching the PyTorch module: x (N, F) -> (A, D) (N, N)."""
    A, D = graph_learning_batched(x[None], weight, steps=1)
    return A[0], D[0]


def _reference(x, weight):
    # Pure-JAX reference mirroring the PyTorch double loop.
    diff = jnp.abs(x[:, None, :] - x[None, :, :])
    s = jnp.exp(jnp.maximum(jnp.sum(diff * weight[0], axis=-1), 0.0))
    A = jax.nn.softmax(s, axis=1)
    D = jnp.sum(A, axis=1)[:, None] * jnp.eye(x.shape[0], dtype=jnp.float32)
    return A, D


if __name__ == "__main__":
    B = 4            # number of graphs batched per call
    N = 8            # number of input vectors per graph (len(inputs))
    IN_FEATURES = 32

    key = jax.random.PRNGKey(0)
    kx, kw = jax.random.split(key)

    xs = jax.random.normal(kx, (B, N, IN_FEATURES), dtype=jnp.float32)

    # Deterministic init matching nn.Module: uniform(-stdv, stdv), stdv = 1/sqrt(F)
    stdv = 1.0 / math.sqrt(IN_FEATURES)
    weight = jax.random.uniform(
        kw, (1, IN_FEATURES), dtype=jnp.float32, minval=-stdv, maxval=stdv
    )

    # Primary path: single grid step holding all graphs (v5e/v6e best case).
    A_b, D_b = graph_learning_batched(xs, weight, steps=1)
    jax.block_until_ready((A_b, D_b))

    # v7x-style path: 2 steps x (B/2) graphs, one per TensorCore; runs
    # correctly (serially) on single-TC chips too.
    A_2, D_2 = graph_learning_batched(xs, weight, steps=2)
    jax.block_until_ready((A_2, D_2))

    # Single-graph path (module-equivalent signature).
    A0, D0 = graph_learning(xs[0], weight)
    jax.block_until_ready((A0, D0))

    # Check against the pure-JAX reference.
    A_ref, D_ref = jax.vmap(_reference, in_axes=(0, None))(xs, weight)
    assert jnp.allclose(A_b, A_ref, atol=1e-5, rtol=1e-5), "A mismatch (steps=1)"
    assert jnp.allclose(D_b, D_ref, atol=1e-5, rtol=1e-5), "D mismatch (steps=1)"
    assert jnp.allclose(A_2, A_ref, atol=1e-5, rtol=1e-5), "A mismatch (steps=2)"
    assert jnp.allclose(D_2, D_ref, atol=1e-5, rtol=1e-5), "D mismatch (steps=2)"
    assert jnp.allclose(A0, A_ref[0], atol=1e-5, rtol=1e-5), "A mismatch (single)"
    assert jnp.allclose(D0, D_ref[0], atol=1e-5, rtol=1e-5), "D mismatch (single)"

    print("KERNEL_OK")
</pallas_src>

<mosaic_0001>
module attributes {stable_mosaic.version = 11 : i64} {
  func.func @graph_learning_kernel(%arg0: i32, %arg1: memref<4x8x32xf32, #tpu.memory_space<vmem>>, %arg2: memref<1x32xf32, #tpu.memory_space<vmem>>, %arg3: memref<4x8x8xf32, #tpu.memory_space<vmem>>) attributes {dimension_semantics = [#tpu.dimension_semantics<parallel>], iteration_bounds = array<i64: 1>, scalar_prefetch = 0 : i64, scratch_operands = 0 : i64, tpu.core_type = #tpu.core_type<tc>, window_params = [{transform_indices = @transform_0, window_bounds = array<i64: 4, 8, 32>}, {pipeline_mode = #tpu.pipeline_mode<synchronous>, transform_indices = @transform_1, window_bounds = array<i64: 1, 32>}, {transform_indices = @transform_2, window_bounds = array<i64: 4, 8, 8>}]} {
    %c0 = arith.constant 0 : index
    %c0_0 = arith.constant 0 : index
    %0 = vector.load %arg2[%c0, %c0_0] : memref<1x32xf32, #tpu.memory_space<vmem>>, vector<1x32xf32>
    %1 = vector.shape_cast %0 : vector<1x32xf32> to vector<32xf32>
    %2 = vector.shape_cast %1 : vector<32xf32> to vector<1x1x32xf32>
    %3 = vector.shape_cast %2 : vector<1x1x32xf32> to vector<1x1x32xf32>
    %4 = vector.broadcast %3 : vector<1x1x32xf32> to vector<8x8x32xf32>
    %c0_1 = arith.constant 0 : index
    %c0_2 = arith.constant 0 : index
    %c0_3 = arith.constant 0 : index
    %5 = vector.load %arg1[%c0_1, %c0_2, %c0_3] : memref<4x8x32xf32, #tpu.memory_space<vmem>>, vector<1x8x32xf32>
    %6 = vector.shape_cast %5 : vector<1x8x32xf32> to vector<8x32xf32>
    %7 = vector.shape_cast %6 : vector<8x32xf32> to vector<8x1x32xf32>
    %8 = vector.shape_cast %6 : vector<8x32xf32> to vector<1x8x32xf32>
    %9 = vector.broadcast %7 : vector<8x1x32xf32> to vector<8x8x32xf32>
    %10 = vector.broadcast %8 : vector<1x8x32xf32> to vector<8x8x32xf32>
    %11 = arith.subf %9, %10 : vector<8x8x32xf32>
    %12 = math.absf %11 : vector<8x8x32xf32>
    %13 = arith.mulf %12, %4 : vector<8x8x32xf32>
    %cst = arith.constant dense<0.000000e+00> : vector<8x8xf32>
    %14 = vector.multi_reduction <add>, %13, %cst [2] : vector<8x8x32xf32> to vector<8x8xf32>
    %cst_4 = arith.constant 0.000000e+00 : f32
    %15 = vector.broadcast %cst_4 : f32 to vector<8x8xf32>
    %16 = arith.maximumf %14, %15 : vector<8x8xf32>
    %17 = math.exp %16 : vector<8x8xf32>
    %cst_5 = arith.constant dense<0xFF800000> : vector<8xf32>
    %18 = vector.multi_reduction <maximumf>, %17, %cst_5 [1] : vector<8x8xf32> to vector<8xf32>
    %19 = vector.shape_cast %18 : vector<8xf32> to vector<8x1xf32>
    %20 = vector.broadcast %19 : vector<8x1xf32> to vector<8x8xf32>
    %21 = arith.subf %17, %20 : vector<8x8xf32>
    %22 = math.exp %21 : vector<8x8xf32>
    %cst_6 = arith.constant dense<0.000000e+00> : vector<8xf32>
    %23 = vector.multi_reduction <add>, %22, %cst_6 [1] : vector<8x8xf32> to vector<8xf32>
    %24 = vector.shape_cast %23 : vector<8xf32> to vector<8x1xf32>
    %25 = vector.broadcast %24 : vector<8x1xf32> to vector<8x8xf32>
    %26 = arith.divf %22, %25 : vector<8x8xf32>
    %c0_7 = arith.constant 0 : index
    %c0_8 = arith.constant 0 : index
    %c0_9 = arith.constant 0 : index
    %27 = vector.load %arg3[%c0_7, %c0_8, %c0_9] : memref<4x8x8xf32, #tpu.memory_space<vmem>>, vector<1x8x8xf32>
    %28 = vector.shape_cast %27 : vector<1x8x8xf32> to vector<8x8xf32>
    %29 = vector.shape_cast %26 : vector<8x8xf32> to vector<1x8x8xf32>
    tpu.vector_store %arg3[%c0_7, %c0_8, %c0_9], %29 {strides = array<i32>} : memref<4x8x8xf32, #tpu.memory_space<vmem>>, vector<1x8x8xf32>,
    %c1 = arith.constant 1 : index
    %c0_10 = arith.constant 0 : index
    %c0_11 = arith.constant 0 : index
    %30 = vector.load %arg1[%c1, %c0_10, %c0_11] : memref<4x8x32xf32, #tpu.memory_space<vmem>>, vector<1x8x32xf32>
    %31 = vector.shape_cast %30 : vector<1x8x32xf32> to vector<8x32xf32>
    %32 = vector.shape_cast %31 : vector<8x32xf32> to vector<8x1x32xf32>
    %33 = vector.shape_cast %31 : vector<8x32xf32> to vector<1x8x32xf32>
    %34 = vector.broadcast %32 : vector<8x1x32xf32> to vector<8x8x32xf32>
    %35 = vector.broadcast %33 : vector<1x8x32xf32> to vector<8x8x32xf32>
    %36 = arith.subf %34, %35 : vector<8x8x32xf32>
    %37 = math.absf %36 : vector<8x8x32xf32>
    %38 = arith.mulf %37, %4 : vector<8x8x32xf32>
    %cst_12 = arith.constant dense<0.000000e+00> : vector<8x8xf32>
    %39 = vector.multi_reduction <add>, %38, %cst_12 [2] : vector<8x8x32xf32> to vector<8x8xf32>
    %cst_13 = arith.constant 0.000000e+00 : f32
    %40 = vector.broadcast %cst_13 : f32 to vector<8x8xf32>
    %41 = arith.maximumf %39, %40 : vector<8x8xf32>
    %42 = math.exp %41 : vector<8x8xf32>
    %cst_14 = arith.constant dense<0xFF800000> : vector<8xf32>
    %43 = vector.multi_reduction <maximumf>, %42, %cst_14 [1] : vector<8x8xf32> to vector<8xf32>
    %44 = vector.shape_cast %43 : vector<8xf32> to vector<8x1xf32>
    %45 = vector.broadcast %44 : vector<8x1xf32> to vector<8x8xf32>
    %46 = arith.subf %42, %45 : vector<8x8xf32>
    %47 = math.exp %46 : vector<8x8xf32>
    %cst_15 = arith.constant dense<0.000000e+00> : vector<8xf32>
    %48 = vector.multi_reduction <add>, %47, %cst_15 [1] : vector<8x8xf32> to vector<8xf32>
    %49 = vector.shape_cast %48 : vector<8xf32> to vector<8x1xf32>
    %50 = vector.broadcast %49 : vector<8x1xf32> to vector<8x8xf32>
    %51 = arith.divf %47, %50 : vector<8x8xf32>
    %c1_16 = arith.constant 1 : index
    %c0_17 = arith.constant 0 : index
    %c0_18 = arith.constant 0 : index
    %52 = vector.load %arg3[%c1_16, %c0_17, %c0_18] : memref<4x8x8xf32, #tpu.memory_space<vmem>>, vector<1x8x8xf32>
    %53 = vector.shape_cast %52 : vector<1x8x8xf32> to vector<8x8xf32>
    %54 = vector.shape_cast %51 : vector<8x8xf32> to vector<1x8x8xf32>
    tpu.vector_store %arg3[%c1_16, %c0_17, %c0_18], %54 {strides = array<i32>} : memref<4x8x8xf32, #tpu.memory_space<vmem>>, vector<1x8x8xf32>,
    %c2 = arith.constant 2 : index
    %c0_19 = arith.constant 0 : index
    %c0_20 = arith.constant 0 : index
    %55 = vector.load %arg1[%c2, %c0_19, %c0_20] : memref<4x8x32xf32, #tpu.memory_space<vmem>>, vector<1x8x32xf32>
    %56 = vector.shape_cast %55 : vector<1x8x32xf32> to vector<8x32xf32>
    %57 = vector.shape_cast %56 : vector<8x32xf32> to vector<8x1x32xf32>
    %58 = vector.shape_cast %56 : vector<8x32xf32> to vector<1x8x32xf32>
    %59 = vector.broadcast %57 : vector<8x1x32xf32> to vector<8x8x32xf32>
    %60 = vector.broadcast %58 : vector<1x8x32xf32> to vector<8x8x32xf32>
    %61 = arith.subf %59, %60 : vector<8x8x32xf32>
    %62 = math.absf %61 : vector<8x8x32xf32>
    %63 = arith.mulf %62, %4 : vector<8x8x32xf32>
    %cst_21 = arith.constant dense<0.000000e+00> : vector<8x8xf32>
    %64 = vector.multi_reduction <add>, %63, %cst_21 [2] : vector<8x8x32xf32> to vector<8x8xf32>
    %cst_22 = arith.constant 0.000000e+00 : f32
    %65 = vector.broadcast %cst_22 : f32 to vector<8x8xf32>
    %66 = arith.maximumf %64, %65 : vector<8x8xf32>
    %67 = math.exp %66 : vector<8x8xf32>
    %cst_23 = arith.constant dense<0xFF800000> : vector<8xf32>
    %68 = vector.multi_reduction <maximumf>, %67, %cst_23 [1] : vector<8x8xf32> to vector<8xf32>
    %69 = vector.shape_cast %68 : vector<8xf32> to vector<8x1xf32>
    %70 = vector.broadcast %69 : vector<8x1xf32> to vector<8x8xf32>
    %71 = arith.subf %67, %70 : vector<8x8xf32>
    %72 = math.exp %71 : vector<8x8xf32>
    %cst_24 = arith.constant dense<0.000000e+00> : vector<8xf32>
    %73 = vector.multi_reduction <add>, %72, %cst_24 [1] : vector<8x8xf32> to vector<8xf32>
    %74 = vector.shape_cast %73 : vector<8xf32> to vector<8x1xf32>
    %75 = vector.broadcast %74 : vector<8x1xf32> to vector<8x8xf32>
    %76 = arith.divf %72, %75 : vector<8x8xf32>
    %c2_25 = arith.constant 2 : index
    %c0_26 = arith.constant 0 : index
    %c0_27 = arith.constant 0 : index
    %77 = vector.load %arg3[%c2_25, %c0_26, %c0_27] : memref<4x8x8xf32, #tpu.memory_space<vmem>>, vector<1x8x8xf32>
    %78 = vector.shape_cast %77 : vector<1x8x8xf32> to vector<8x8xf32>
    %79 = vector.shape_cast %76 : vector<8x8xf32> to vector<1x8x8xf32>
    tpu.vector_store %arg3[%c2_25, %c0_26, %c0_27], %79 {strides = array<i32>} : memref<4x8x8xf32, #tpu.memory_space<vmem>>, vector<1x8x8xf32>,
    %c3 = arith.constant 3 : index
    %c0_28 = arith.constant 0 : index
    %c0_29 = arith.constant 0 : index
    %80 = vector.load %arg1[%c3, %c0_28, %c0_29] : memref<4x8x32xf32, #tpu.memory_space<vmem>>, vector<1x8x32xf32>
    %81 = vector.shape_cast %80 : vector<1x8x32xf32> to vector<8x32xf32>
    %82 = vector.shape_cast %81 : vector<8x32xf32> to vector<8x1x32xf32>
    %83 = vector.shape_cast %81 : vector<8x32xf32> to vector<1x8x32xf32>
    %84 = vector.broadcast %82 : vector<8x1x32xf32> to vector<8x8x32xf32>
    %85 = vector.broadcast %83 : vector<1x8x32xf32> to vector<8x8x32xf32>
    %86 = arith.subf %84, %85 : vector<8x8x32xf32>
    %87 = math.absf %86 : vector<8x8x32xf32>
    %88 = arith.mulf %87, %4 : vector<8x8x32xf32>
    %cst_30 = arith.constant dense<0.000000e+00> : vector<8x8xf32>
    %89 = vector.multi_reduction <add>, %88, %cst_30 [2] : vector<8x8x32xf32> to vector<8x8xf32>
    %cst_31 = arith.constant 0.000000e+00 : f32
    %90 = vector.broadcast %cst_31 : f32 to vector<8x8xf32>
    %91 = arith.maximumf %89, %90 : vector<8x8xf32>
    %92 = math.exp %91 : vector<8x8xf32>
    %cst_32 = arith.constant dense<0xFF800000> : vector<8xf32>
    %93 = vector.multi_reduction <maximumf>, %92, %cst_32 [1] : vector<8x8xf32> to vector<8xf32>
    %94 = vector.shape_cast %93 : vector<8xf32> to vector<8x1xf32>
    %95 = vector.broadcast %94 : vector<8x1xf32> to vector<8x8xf32>
    %96 = arith.subf %92, %95 : vector<8x8xf32>
    %97 = math.exp %96 : vector<8x8xf32>
    %cst_33 = arith.constant dense<0.000000e+00> : vector<8xf32>
    %98 = vector.multi_reduction <add>, %97, %cst_33 [1] : vector<8x8xf32> to vector<8xf32>
    %99 = vector.shape_cast %98 : vector<8xf32> to vector<8x1xf32>
    %100 = vector.broadcast %99 : vector<8x1xf32> to vector<8x8xf32>
    %101 = arith.divf %97, %100 : vector<8x8xf32>
    %c3_34 = arith.constant 3 : index
    %c0_35 = arith.constant 0 : index
    %c0_36 = arith.constant 0 : index
    %102 = vector.load %arg3[%c3_34, %c0_35, %c0_36] : memref<4x8x8xf32, #tpu.memory_space<vmem>>, vector<1x8x8xf32>
    %103 = vector.shape_cast %102 : vector<1x8x8xf32> to vector<8x8xf32>
    %104 = vector.shape_cast %101 : vector<8x8xf32> to vector<1x8x8xf32>
    tpu.vector_store %arg3[%c3_34, %c0_35, %c0_36], %104 {strides = array<i32>} : memref<4x8x8xf32, #tpu.memory_space<vmem>>, vector<1x8x8xf32>,
    return
  }
  func.func @transform_0(%arg0: i32) -> (i32, i32, i32) {
    %c0_i32 = arith.constant 0 : i32
    %c0_i32_0 = arith.constant 0 : i32
    %c0_i32_1 = arith.constant 0 : i32
    return %arg0, %c0_i32, %c0_i32_0 : i32, i32, i32
  }
  func.func @transform_1(%arg0: i32) -> (i32, i32) {
    %c0_i32 = arith.constant 0 : i32
    %c0_i32_0 = arith.constant 0 : i32
    %c0_i32_1 = arith.constant 0 : i32
    return %c0_i32, %c0_i32_0 : i32, i32
  }
  func.func @transform_2(%arg0: i32) -> (i32, i32, i32) {
    %c0_i32 = arith.constant 0 : i32
    %c0_i32_0 = arith.constant 0 : i32
    %c0_i32_1 = arith.constant 0 : i32
    return %arg0, %c0_i32, %c0_i32_0 : i32, i32, i32
  }
}

</mosaic_0001>

<llo_original>
// kernel: tpu_custom_call.1
$region0: #{tpu_custom_call.1}
  #allocation0 [shape = 'u32[]', space=smem, size = 0x4, offset = 0x4, fixed_abs, tag = 'smem constant byte address 0x4 - core index']
  #allocation1 [shape = 'u32[144,128]{1,0:T(1,128)}', space=vmem, size = 0x12000, scoped, tag = 'internal scratch']
  %s0 = inlined_call_operand.hbm [shape: f32[4,8,32], index: 0, kind: input, shape index: {}]
  %s1 = inlined_call_operand.vmem [shape: f32[1,32], index: 1, kind: input, shape index: {}]
  %s2 = inlined_call_operand.hbm [shape: f32[4,8,8], index: 2, kind: output, shape index: {}]
  %s3 = sld [smem:[#allocation0]]
  $region22: #{tpu_custom_call.1} parent=0
    _
  %s5 = ssub.s32 1, %s3
  %s6 = scalar_select 0, %s5, %s3
  $region1: #{tpu_custom_call.1} parent=0
    #allocation2 [shape = 'u8[16384]{0}', space=vmem, size = 0x4000, scoped, tag = 'input window, operand 0, single buffered']
    #allocation3 [shape = 's32[1]{0}', space=sflag, size = 0x4, scoped, tag = 'scoped memory for tpu_custom_call.1']
    #allocation4 [shape = 's32[1]{0}', space=sflag, size = 0x4, scoped, tag = 'scoped memory for tpu_custom_call.1']
    #allocation5 [shape = 'u8[16384]{0}', space=vmem, size = 0x4000, scoped, tag = 'output window, operand 0, single buffered']
    %7 = vsyncpa [#allocation3], 0
    %8 = vsyncpa [#allocation4], 0
    // Predicated region
    $region2: #{tpu_custom_call.1} parent=1 // pred_check
      _
    $region3: #{tpu_custom_call.1} parent=1 // pred_check_branch
      %10 = sbr.rel (0) target = $region5
    $region4: #{tpu_custom_call.1} parent=1 // pred_region
      %s12 = ssub.s32 512, 512
      %13 = vsyncadd [#allocation3], %s12
      %s14 = sshll.u32 [#allocation2], 4
      %s15 = int_to_ptr.vmem [resolvable:$true] %s14
      %20 = dma.hbm_to_vmem [thread:$0]  %s0, 512, %s15, [#allocation3], 128, 128, 8
    $region5: #{tpu_custom_call.1} parent=1 // pred_fallthru
      _
    // Predicated region
    $region6: #{tpu_custom_call.1} parent=1 // pred_check
      _
    $region7: #{tpu_custom_call.1} parent=1 // pred_check_branch
      %22 = sbr.rel (0) target = $region9
    $region8: #{tpu_custom_call.1} parent=1 // pred_region
      _
    $region9: #{tpu_custom_call.1} parent=1 // pred_fallthru
      _
    // Predicated region
    $region10: #{tpu_custom_call.1} parent=1 // pred_check
      _
    $region11: #{tpu_custom_call.1} parent=1 // pred_check_branch
      %24 = sbr.rel (0) target = $region13
    $region12: #{tpu_custom_call.1} parent=1 // pred_region
      %25 = dma.done [#allocation3], 512
    $region13: #{tpu_custom_call.1} parent=1 // pred_fallthru
      _
    %v26 = vld [vmem:[%s1] sm:$0x1]
    %v28 = vlaneseq
    %v29 = vshrl.u32 %v28, 7
    %v30 = vsub.s32 0, %v29
    %v31 = vrot.slane %v26, %v30
    %v33 = vld [vmem:[#allocation2] sm:$0xff]
    %v35 = vcombine.high %v33, %v33
    %v37 = vunpack.c.l.s4 1966171168
    %v38 = vunpack.c.0.s8 %v37
    %v39 = vlaneseq
    %v40 = vshrl.u32 %v39, 7
    %v41 = vsub.s32 %v38, %v40
    %v42 = vrot.slane %v33, %v41
    %v44 = vunpack.c.l.s4 1966171168
    %v45 = vunpack.c.0.s8 %v44
    %v46 = vlaneseq
    %v47 = vshrl.u32 %v46, 7
    %v48 = vsub.s32 %v45, %v47
    %v49 = vrot.slane %v35, %v48
    %v50 = vcombine.high %v42, %v42
    %v51 = vcombine.high %v49, %v49
    %v53 = vunpack.c.l.s4 1966171168
    %v54 = vunpack.c.0.s8 %v53
    %v55 = vlaneseq
    %v56 = vshrl.u32 %v55, 7
    %v57 = vsub.s32 %v54, %v56
    %v58 = vrot.slane %v42, %v57
    %v60 = vunpack.c.l.s4 1966171168
    %v61 = vunpack.c.0.s8 %v60
    %v62 = vlaneseq
    %v63 = vshrl.u32 %v62, 7
    %v64 = vsub.s32 %v61, %v63
    %v65 = vrot.slane %v49, %v64
    %v67 = vunpack.c.l.s4 1966171168
    %v68 = vunpack.c.0.s8 %v67
    %v69 = vlaneseq
    %v70 = vshrl.u32 %v69, 7
    %v71 = vsub.s32 %v68, %v70
    %v72 = vrot.slane %v50, %v71
    %v74 = vunpack.c.l.s4 1966171168
    %v75 = vunpack.c.0.s8 %v74
    %v76 = vlaneseq
    %v77 = vshrl.u32 %v76, 7
    %v78 = vsub.s32 %v75, %v77
    %v79 = vrot.slane %v51, %v78
    %v80 = vcombine.high %v58, %v58
    %v81 = vcombine.high %v65, %v65
    %v82 = vcombine.high %v72, %v72
    %v83 = vcombine.high %v79, %v79
    %v84 = vlaneseq
    %v85 = vshrl.u32 %v84, 7
    %v86 = vsub.s32 0, %v85
    %v87 = vrot.slane %v58, %v86
    %v88 = vlaneseq
    %v89 = vshrl.u32 %v88, 7
    %v90 = vsub.s32 0, %v89
    %v91 = vrot.slane %v72, %v90
    %v92 = vlaneseq
    %v93 = vshrl.u32 %v92, 7
    %v94 = vsub.s32 0, %v93
    %v95 = vrot.slane %v80, %v94
    %v96 = vlaneseq
    %v97 = vshrl.u32 %v96, 7
    %v98 = vsub.s32 0, %v97
    %v99 = vrot.slane %v82, %v98
    %v100 = vlaneseq
    %v101 = vshrl.u32 %v100, 7
    %v102 = vsub.s32 0, %v101
    %v103 = vrot.slane %v65, %v102
    %v104 = vlaneseq
    %v105 = vshrl.u32 %v104, 7
    %v106 = vsub.s32 0, %v105
    %v107 = vrot.slane %v79, %v106
    %v108 = vlaneseq
    %v109 = vshrl.u32 %v108, 7
    %v110 = vsub.s32 0, %v109
    %v111 = vrot.slane %v81, %v110
    %v112 = vlaneseq
    %v113 = vshrl.u32 %v112, 7
    %v114 = vsub.s32 0, %v113
    %v115 = vrot.slane %v83, %v114
    %v124 = vsub.f32 %v87, %v33
    %v125 = vsub.f32 %v91, %v33
    %v126 = vsub.f32 %v95, %v33
    %v127 = vsub.f32 %v99, %v33
    %v128 = vsub.f32 %v103, %v33
    %v129 = vsub.f32 %v107, %v33
    %v130 = vsub.f32 %v111, %v33
    %v131 = vsub.f32 %v115, %v33
    %v132 = vand.u32 2147483647, %v124
    %v133 = vand.u32 2147483647, %v125
    %v134 = vand.u32 2147483647, %v126
    %v135 = vand.u32 2147483647, %v127
    %v136 = vand.u32 2147483647, %v128
    %v137 = vand.u32 2147483647, %v129
    %v138 = vand.u32 2147483647, %v130
    %v139 = vand.u32 2147483647, %v131
    %v140 = vmul.f32 %v132, %v31
    %v141 = vmul.f32 %v133, %v31
    %v142 = vmul.f32 %v134, %v31
    %v143 = vmul.f32 %v135, %v31
    %v144 = vmul.f32 %v136, %v31
    %v145 = vmul.f32 %v137, %v31
    %v146 = vmul.f32 %v138, %v31
    %v147 = vmul.f32 %v139, %v31
    %vm148 = vcmask 261120
    %v149 = vsel %vm148, %v140, 0.0
    %150 = vadd.xlane.f32.xlu0 %v149
    %v151 = vpop.xlane.xlu0 %150
    %v152 = vsel %vm148, %v141, 0.0
    %153 = vadd.xlane.f32.xlu0 %v152
    %v154 = vpop.xlane.xlu0 %153
    %v155 = vsel %vm148, %v142, 0.0
    %156 = vadd.xlane.f32.xlu0 %v155
    %v157 = vpop.xlane.xlu0 %156
    %v158 = vsel %vm148, %v143, 0.0
    %159 = vadd.xlane.f32.xlu0 %v158
    %v160 = vpop.xlane.xlu0 %159
    %v161 = vsel %vm148, %v144, 0.0
    %162 = vadd.xlane.f32.xlu0 %v161
    %v163 = vpop.xlane.xlu0 %162
    %v164 = vsel %vm148, %v145, 0.0
    %165 = vadd.xlane.f32.xlu0 %v164
    %v166 = vpop.xlane.xlu0 %165
    %v167 = vsel %vm148, %v146, 0.0
    %168 = vadd.xlane.f32.xlu0 %v167
    %v169 = vpop.xlane.xlu0 %168
    %v170 = vsel %vm148, %v147, 0.0
    %171 = vadd.xlane.f32.xlu0 %v170
    %v172 = vpop.xlane.xlu0 %171
    %v173 = vmax.f32 %v151, 0.0
    %v174 = vmax.f32 %v154, 0.0
    %v175 = vmax.f32 %v157, 0.0
    %v176 = vmax.f32 %v160, 0.0
    %v177 = vmax.f32 %v163, 0.0
    %v178 = vmax.f32 %v166, 0.0
    %v179 = vmax.f32 %v169, 0.0
    %v180 = vmax.f32 %v172, 0.0
    %v181 = vmul.f32 %v173, 1.442695
    %v182 = vpow.pop %v181
    %v183 = vmul.f32 %v174, 1.442695
    %v184 = vpow.pop %v183
    %v185 = vmul.f32 %v175, 1.442695
    %v186 = vpow.pop %v185
    %v187 = vmul.f32 %v176, 1.442695
    %v188 = vpow.pop %v187
    %v189 = vmul.f32 %v177, 1.442695
    %v190 = vpow.pop %v189
    %v191 = vmul.f32 %v178, 1.442695
    %v192 = vpow.pop %v191
    %v193 = vmul.f32 %v179, 1.442695
    %v194 = vpow.pop %v193
    %v195 = vmul.f32 %v180, 1.442695
    %v196 = vpow.pop %v195
    %v205 = vlaneseq
    %v206 = vand.u32 %v205, 127
    %v207 = vlaneseq
    %v208 = vshrl.u32 %v207, 7
    %v209 = vsub.s32 %v206, %v208
    %v210 = vrot.slane %v182, %v209
    %v211 = vlaneseq
    %v212 = vshrl.u32 %v211, 7
    %v213 = vsub.s32 %v206, %v212
    %v214 = vrot.slane %v184, %v213
    %v215 = vlaneseq
    %v216 = vshrl.u32 %v215, 7
    %v217 = vsub.s32 %v206, %v216
    %v218 = vrot.slane %v186, %v217
    %v219 = vlaneseq
    %v220 = vshrl.u32 %v219, 7
    %v221 = vsub.s32 %v206, %v220
    %v222 = vrot.slane %v188, %v221
    %v223 = vlaneseq
    %v224 = vshrl.u32 %v223, 7
    %v225 = vsub.s32 %v206, %v224
    %v226 = vrot.slane %v190, %v225
    %v227 = vlaneseq
    %v228 = vshrl.u32 %v227, 7
    %v229 = vsub.s32 %v206, %v228
    %v230 = vrot.slane %v192, %v229
    %v231 = vlaneseq
    %v232 = vshrl.u32 %v231, 7
    %v233 = vsub.s32 %v206, %v232
    %v234 = vrot.slane %v194, %v233
    %v235 = vlaneseq
    %v236 = vshrl.u32 %v235, 7
    %v237 = vsub.s32 %v206, %v236
    %v238 = vrot.slane %v196, %v237
    %vm239 = vcmask 1041409
    %v240 = vsel %vm239, %v214, %v210
    %vm241 = vcmask 1042434
    %v242 = vsel %vm241, %v218, %v240
    %vm243 = vcmask 1043459
    %v244 = vsel %vm243, %v222, %v242
    %vm245 = vcmask 1044484
    %v246 = vsel %vm245, %v226, %v244
    %vm247 = vcmask 1045509
    %v248 = vsel %vm247, %v230, %v246
    %vm249 = vcmask 1046534
    %v250 = vsel %vm249, %v234, %v248
    %vm251 = vcmask 1047559
    %v252 = vsel %vm251, %v238, %v250
    %vm254 = vcmask 64512
    %v255 = vsel %vm254, %v252, -inf
    %256 = vmax.xlane.f32.xlu0 %v255
    %v257 = vpop.xlane.xlu0 %256
    %v259 = vlaneseq
    %v260 = vshrl.u32 %v259, 7
    %v261 = vsub.s32 0, %v260
    %v262 = vrot.slane %v257, %v261
    %v263 = vlaneseq
    %v264 = vshrl.u32 %v263, 7
    %v265 = vsub.s32 1, %v264
    %v266 = vrot.slane %v257, %v265
    %v267 = vlaneseq
    %v268 = vshrl.u32 %v267, 7
    %v269 = vsub.s32 2, %v268
    %v270 = vrot.slane %v257, %v269
    %v271 = vlaneseq
    %v272 = vshrl.u32 %v271, 7
    %v273 = vsub.s32 3, %v272
    %v274 = vrot.slane %v257, %v273
    %v275 = vlaneseq
    %v276 = vshrl.u32 %v275, 7
    %v277 = vsub.s32 4, %v276
    %v278 = vrot.slane %v257, %v277
    %v279 = vlaneseq
    %v280 = vshrl.u32 %v279, 7
    %v281 = vsub.s32 5, %v280
    %v282 = vrot.slane %v257, %v281
    %v283 = vlaneseq
    %v284 = vshrl.u32 %v283, 7
    %v285 = vsub.s32 6, %v284
    %v286 = vrot.slane %v257, %v285
    %v287 = vlaneseq
    %v288 = vshrl.u32 %v287, 7
    %v289 = vsub.s32 7, %v288
    %v290 = vrot.slane %v257, %v289
    %v299 = vsub.f32 %v182, %v262
    %v300 = vsub.f32 %v184, %v266
    %v301 = vsub.f32 %v186, %v270
    %v302 = vsub.f32 %v188, %v274
    %v303 = vsub.f32 %v190, %v278
    %v304 = vsub.f32 %v192, %v282
    %v305 = vsub.f32 %v194, %v286
    %v306 = vsub.f32 %v196, %v290
    %v307 = vmul.f32 %v299, 1.442695
    %v308 = vpow.pop %v307
    %v309 = vmul.f32 %v300, 1.442695
    %v310 = vpow.pop %v309
    %v311 = vmul.f32 %v301, 1.442695
    %v312 = vpow.pop %v311
    %v313 = vmul.f32 %v302, 1.442695
    %v314 = vpow.pop %v313
    %v315 = vmul.f32 %v303, 1.442695
    %v316 = vpow.pop %v315
    %v317 = vmul.f32 %v304, 1.442695
    %v318 = vpow.pop %v317
    %v319 = vmul.f32 %v305, 1.442695
    %v320 = vpow.pop %v319
    %v321 = vmul.f32 %v306, 1.442695
    %v322 = vpow.pop %v321
    %331 = vset.pattern.permute.xlu0 0
    %332 = vperm.xlu0 %331, %v308
    %v333 = vpop.permute.xlu0 %332
    %334 = vset.pattern.permute.xlu0 0
    %335 = vperm.xlu0 %334, %v310
    %v336 = vpop.permute.xlu0 %335
    %337 = vset.pattern.permute.xlu0 0
    %338 = vperm.xlu0 %337, %v312
    %v339 = vpop.permute.xlu0 %338
    %340 = vset.pattern.permute.xlu0 0
    %341 = vperm.xlu0 %340, %v314
    %v342 = vpop.permute.xlu0 %341
    %343 = vset.pattern.permute.xlu0 0
    %344 = vperm.xlu0 %343, %v316
    %v345 = vpop.permute.xlu0 %344
    %346 = vset.pattern.permute.xlu0 0
    %347 = vperm.xlu0 %346, %v318
    %v348 = vpop.permute.xlu0 %347
    %349 = vset.pattern.permute.xlu0 0
    %350 = vperm.xlu0 %349, %v320
    %v351 = vpop.permute.xlu0 %350
    %352 = vset.pattern.permute.xlu0 0
    %353 = vperm.xlu0 %352, %v322
    %v354 = vpop.permute.xlu0 %353
    %v355 = vlaneseq
    %v356 = vshrl.u32 %v355, 7
    %v357 = vsub.s32 %v206, %v356
    %v358 = vrot.slane %v333, %v357
    %v359 = vlaneseq
    %v360 = vshrl.u32 %v359, 7
    %v361 = vsub.s32 %v206, %v360
    %v362 = vrot.slane %v336, %v361
    %v363 = vlaneseq
    %v364 = vshrl.u32 %v363, 7
    %v365 = vsub.s32 %v206, %v364
    %v366 = vrot.slane %v339, %v365
    %v367 = vlaneseq
    %v368 = vshrl.u32 %v367, 7
    %v369 = vsub.s32 %v206, %v368
    %v370 = vrot.slane %v342, %v369
    %v371 = vlaneseq
    %v372 = vshrl.u32 %v371, 7
    %v373 = vsub.s32 %v206, %v372
    %v374 = vrot.slane %v345, %v373
    %v375 = vlaneseq
    %v376 = vshrl.u32 %v375, 7
    %v377 = vsub.s32 %v206, %v376
    %v378 = vrot.slane %v348, %v377
    %v379 = vlaneseq
    %v380 = vshrl.u32 %v379, 7
    %v381 = vsub.s32 %v206, %v380
    %v382 = vrot.slane %v351, %v381
    %v383 = vlaneseq
    %v384 = vshrl.u32 %v383, 7
    %v385 = vsub.s32 %v206, %v384
    %v386 = vrot.slane %v354, %v385
    %v387 = vsel %vm239, %v362, %v358
    %v388 = vsel %vm241, %v366, %v387
    %v389 = vsel %vm243, %v370, %v388
    %v390 = vsel %vm245, %v374, %v389
    %v391 = vsel %vm247, %v378, %v390
    %v392 = vsel %vm249, %v382, %v391
    %v393 = vsel %vm251, %v386, %v392
    %v395 = vsel %vm254, %v393, 0.0
    %396 = vadd.xlane.f32.xlu0 %v395
    %v397 = vpop.xlane.xlu0 %396
    %v399 = vlaneseq
    %v400 = vshrl.u32 %v399, 7
    %v401 = vsub.s32 0, %v400
    %v402 = vrot.slane %v397, %v401
    %v403 = vlaneseq
    %v404 = vshrl.u32 %v403, 7
    %v405 = vsub.s32 1, %v404
    %v406 = vrot.slane %v397, %v405
    %v407 = vlaneseq
    %v408 = vshrl.u32 %v407, 7
    %v409 = vsub.s32 2, %v408
    %v410 = vrot.slane %v397, %v409
    %v411 = vlaneseq
    %v412 = vshrl.u32 %v411, 7
    %v413 = vsub.s32 3, %v412
    %v414 = vrot.slane %v397, %v413
    %v415 = vlaneseq
    %v416 = vshrl.u32 %v415, 7
    %v417 = vsub.s32 4, %v416
    %v418 = vrot.slane %v397, %v417
    %v419 = vlaneseq
    %v420 = vshrl.u32 %v419, 7
    %v421 = vsub.s32 5, %v420
    %v422 = vrot.slane %v397, %v421
    %v423 = vlaneseq
    %v424 = vshrl.u32 %v423, 7
    %v425 = vsub.s32 6, %v424
    %v426 = vrot.slane %v397, %v425
    %v427 = vlaneseq
    %v428 = vshrl.u32 %v427, 7
    %v429 = vsub.s32 7, %v428
    %v430 = vrot.slane %v397, %v429
    %v439 = vrcp.pop %v402
    %v440 = vmul.f32 %v308, %v439
    %v441 = vrcp.pop %v406
    %v442 = vmul.f32 %v310, %v441
    %v443 = vrcp.pop %v410
    %v444 = vmul.f32 %v312, %v443
    %v445 = vrcp.pop %v414
    %v446 = vmul.f32 %v314, %v445
    %v447 = vrcp.pop %v418
    %v448 = vmul.f32 %v316, %v447
    %v449 = vrcp.pop %v422
    %v450 = vmul.f32 %v318, %v449
    %v451 = vrcp.pop %v426
    %v452 = vmul.f32 %v320, %v451
    %v453 = vrcp.pop %v430
    %v454 = vmul.f32 %v322, %v453
    %463 = vset.pattern.permute.xlu0 0
    %464 = vperm.xlu0 %463, %v440
    %v465 = vpop.permute.xlu0 %464
    %466 = vset.pattern.permute.xlu0 0
    %467 = vperm.xlu0 %466, %v442
    %v468 = vpop.permute.xlu0 %467
    %469 = vset.pattern.permute.xlu0 0
    %470 = vperm.xlu0 %469, %v444
    %v471 = vpop.permute.xlu0 %470
    %472 = vset.pattern.permute.xlu0 0
    %473 = vperm.xlu0 %472, %v446
    %v474 = vpop.permute.xlu0 %473
    %475 = vset.pattern.permute.xlu0 0
    %476 = vperm.xlu0 %475, %v448
    %v477 = vpop.permute.xlu0 %476
    %478 = vset.pattern.permute.xlu0 0
    %479 = vperm.xlu0 %478, %v450
    %v480 = vpop.permute.xlu0 %479
    %481 = vset.pattern.permute.xlu0 0
    %482 = vperm.xlu0 %481, %v452
    %v483 = vpop.permute.xlu0 %482
    %484 = vset.pattern.permute.xlu0 0
    %485 = vperm.xlu0 %484, %v454
    %v486 = vpop.permute.xlu0 %485
    %v487 = vlaneseq
    %v488 = vshrl.u32 %v487, 7
    %v489 = vsub.s32 %v206, %v488
    %v490 = vrot.slane %v465, %v489
    %v491 = vlaneseq
    %v492 = vshrl.u32 %v491, 7
    %v493 = vsub.s32 %v206, %v492
    %v494 = vrot.slane %v468, %v493
    %v495 = vlaneseq
    %v496 = vshrl.u32 %v495, 7
    %v497 = vsub.s32 %v206, %v496
    %v498 = vrot.slane %v471, %v497
    %v499 = vlaneseq
    %v500 = vshrl.u32 %v499, 7
    %v501 = vsub.s32 %v206, %v500
    %v502 = vrot.slane %v474, %v501
    %v503 = vlaneseq
    %v504 = vshrl.u32 %v503, 7
    %v505 = vsub.s32 %v206, %v504
    %v506 = vrot.slane %v477, %v505
    %v507 = vlaneseq
    %v508 = vshrl.u32 %v507, 7
    %v509 = vsub.s32 %v206, %v508
    %v510 = vrot.slane %v480, %v509
    %v511 = vlaneseq
    %v512 = vshrl.u32 %v511, 7
    %v513 = vsub.s32 %v206, %v512
    %v514 = vrot.slane %v483, %v513
    %v515 = vlaneseq
    %v516 = vshrl.u32 %v515, 7
    %v517 = vsub.s32 %v206, %v516
    %v518 = vrot.slane %v486, %v517
    %v519 = vsel %vm239, %v494, %v490
    %v520 = vsel %vm241, %v498, %v519
    %v521 = vsel %vm243, %v502, %v520
    %v522 = vsel %vm245, %v506, %v521
    %v523 = vsel %vm247, %v510, %v522
    %v524 = vsel %vm249, %v514, %v523
    %v525 = vsel %vm251, %v518, %v524
    %527 = vst.msk [vmem:[#allocation5] sm:$0xff] %vm254, %v525
    %s528 = scalar_lea.vmem [#allocation2], 8
    %v529 = vld [vmem:[%s528] sm:$0xff]
    %v531 = vcombine.high %v529, %v529
    %v533 = vunpack.c.l.s4 1966171168
    %v534 = vunpack.c.0.s8 %v533
    %v535 = vlaneseq
    %v536 = vshrl.u32 %v535, 7
    %v537 = vsub.s32 %v534, %v536
    %v538 = vrot.slane %v529, %v537
    %v540 = vunpack.c.l.s4 1966171168
    %v541 = vunpack.c.0.s8 %v540
    %v542 = vlaneseq
    %v543 = vshrl.u32 %v542, 7
    %v544 = vsub.s32 %v541, %v543
    %v545 = vrot.slane %v531, %v544
    %v546 = vcombine.high %v538, %v538
    %v547 = vcombine.high %v545, %v545
    %v549 = vunpack.c.l.s4 1966171168
    %v550 = vunpack.c.0.s8 %v549
    %v551 = vlaneseq
    %v552 = vshrl.u32 %v551, 7
    %v553 = vsub.s32 %v550, %v552
    %v554 = vrot.slane %v538, %v553
    %v556 = vunpack.c.l.s4 1966171168
    %v557 = vunpack.c.0.s8 %v556
    %v558 = vlaneseq
    %v559 = vshrl.u32 %v558, 7
    %v560 = vsub.s32 %v557, %v559
    %v561 = vrot.slane %v545, %v560
    %v563 = vunpack.c.l.s4 1966171168
    %v564 = vunpack.c.0.s8 %v563
    %v565 = vlaneseq
    %v566 = vshrl.u32 %v565, 7
    %v567 = vsub.s32 %v564, %v566
    %v568 = vrot.slane %v546, %v567
    %v570 = vunpack.c.l.s4 1966171168
    %v571 = vunpack.c.0.s8 %v570
    %v572 = vlaneseq
    %v573 = vshrl.u32 %v572, 7
    %v574 = vsub.s32 %v571, %v573
    %v575 = vrot.slane %v547, %v574
    %v576 = vcombine.high %v554, %v554
    %v577 = vcombine.high %v561, %v561
    %v578 = vcombine.high %v568, %v568
    %v579 = vcombine.high %v575, %v575
    %v580 = vlaneseq
    %v581 = vshrl.u32 %v580, 7
    %v582 = vsub.s32 0, %v581
    %v583 = vrot.slane %v554, %v582
    %v584 = vlaneseq
    %v585 = vshrl.u32 %v584, 7
    %v586 = vsub.s32 0, %v585
    %v587 = vrot.slane %v568, %v586
    %v588 = vlaneseq
    %v589 = vshrl.u32 %v588, 7
    %v590 = vsub.s32 0, %v589
    %v591 = vrot.slane %v576, %v590
    %v592 = vlaneseq
    %v593 = vshrl.u32 %v592, 7
    %v594 = vsub.s32 0, %v593
    %v595 = vrot.slane %v578, %v594
    %v596 = vlaneseq
    %v597 = vshrl.u32 %v596, 7
    %v598 = vsub.s32 0, %v597
    %v599 = vrot.slane %v561, %v598
    %v600 = vlaneseq
    %v601 = vshrl.u32 %v600, 7
    %v602 = vsub.s32 0, %v601
    %v603 = vrot.slane %v575, %v602
    %v604 = vlaneseq
    %v605 = vshrl.u32 %v604, 7
    %v606 = vsub.s32 0, %v605
    %v607 = vrot.slane %v577, %v606
    %v608 = vlaneseq
    %v609 = vshrl.u32 %v608, 7
    %v610 = vsub.s32 0, %v609
    %v611 = vrot.slane %v579, %v610
    %v620 = vsub.f32 %v583, %v529
    %v621 = vsub.f32 %v587, %v529
    %v622 = vsub.f32 %v591, %v529
    %v623 = vsub.f32 %v595, %v529
    %v624 = vsub.f32 %v599, %v529
    %v625 = vsub.f32 %v603, %v529
    %v626 = vsub.f32 %v607, %v529
    %v627 = vsub.f32 %v611, %v529
    %v628 = vand.u32 2147483647, %v620
    %v629 = vand.u32 2147483647, %v621
    %v630 = vand.u32 2147483647, %v622
    %v631 = vand.u32 2147483647, %v623
    %v632 = vand.u32 2147483647, %v624
    %v633 = vand.u32 2147483647, %v625
    %v634 = vand.u32 2147483647, %v626
    %v635 = vand.u32 2147483647, %v627
    %v636 = vmul.f32 %v628, %v31
    %v637 = vmul.f32 %v629, %v31
    %v638 = vmul.f32 %v630, %v31
    %v639 = vmul.f32 %v631, %v31
    %v640 = vmul.f32 %v632, %v31
    %v641 = vmul.f32 %v633, %v31
    %v642 = vmul.f32 %v634, %v31
    %v643 = vmul.f32 %v635, %v31
    %v644 = vsel %vm148, %v636, 0.0
    %645 = vadd.xlane.f32.xlu0 %v644
    %v646 = vpop.xlane.xlu0 %645
    %v647 = vsel %vm148, %v637, 0.0
    %648 = vadd.xlane.f32.xlu0 %v647
    %v649 = vpop.xlane.xlu0 %648
    %v650 = vsel %vm148, %v638, 0.0
    %651 = vadd.xlane.f32.xlu0 %v650
    %v652 = vpop.xlane.xlu0 %651
    %v653 = vsel %vm148, %v639, 0.0
    %654 = vadd.xlane.f32.xlu0 %v653
    %v655 = vpop.xlane.xlu0 %654
    %v656 = vsel %vm148, %v640, 0.0
    %657 = vadd.xlane.f32.xlu0 %v656
    %v658 = vpop.xlane.xlu0 %657
    %v659 = vsel %vm148, %v641, 0.0
    %660 = vadd.xlane.f32.xlu0 %v659
    %v661 = vpop.xlane.xlu0 %660
    %v662 = vsel %vm148, %v642, 0.0
    %663 = vadd.xlane.f32.xlu0 %v662
    %v664 = vpop.xlane.xlu0 %663
    %v665 = vsel %vm148, %v643, 0.0
    %666 = vadd.xlane.f32.xlu0 %v665
    %v667 = vpop.xlane.xlu0 %666
    %v668 = vmax.f32 %v646, 0.0
    %v669 = vmax.f32 %v649, 0.0
    %v670 = vmax.f32 %v652, 0.0
    %v671 = vmax.f32 %v655, 0.0
    %v672 = vmax.f32 %v658, 0.0
    %v673 = vmax.f32 %v661, 0.0
    %v674 = vmax.f32 %v664, 0.0
    %v675 = vmax.f32 %v667, 0.0
    %v676 = vmul.f32 %v668, 1.442695
    %v677 = vpow.pop %v676
    %v678 = vmul.f32 %v669, 1.442695
    %v679 = vpow.pop %v678
    %v680 = vmul.f32 %v670, 1.442695
    %v681 = vpow.pop %v680
    %v682 = vmul.f32 %v671, 1.442695
    %v683 = vpow.pop %v682
    %v684 = vmul.f32 %v672, 1.442695
    %v685 = vpow.pop %v684
    %v686 = vmul.f32 %v673, 1.442695
    %v687 = vpow.pop %v686
    %v688 = vmul.f32 %v674, 1.442695
    %v689 = vpow.pop %v688
    %v690 = vmul.f32 %v675, 1.442695
    %v691 = vpow.pop %v690
    %v700 = vlaneseq
    %v701 = vshrl.u32 %v700, 7
    %v702 = vsub.s32 %v206, %v701
    %v703 = vrot.slane %v677, %v702
    %v704 = vlaneseq
    %v705 = vshrl.u32 %v704, 7
    %v706 = vsub.s32 %v206, %v705
    %v707 = vrot.slane %v679, %v706
    %v708 = vlaneseq
    %v709 = vshrl.u32 %v708, 7
    %v710 = vsub.s32 %v206, %v709
    %v711 = vrot.slane %v681, %v710
    %v712 = vlaneseq
    %v713 = vshrl.u32 %v712, 7
    %v714 = vsub.s32 %v206, %v713
    %v715 = vrot.slane %v683, %v714
    %v716 = vlaneseq
    %v717 = vshrl.u32 %v716, 7
    %v718 = vsub.s32 %v206, %v717
    %v719 = vrot.slane %v685, %v718
    %v720 = vlaneseq
    %v721 = vshrl.u32 %v720, 7
    %v722 = vsub.s32 %v206, %v721
    %v723 = vrot.slane %v687, %v722
    %v724 = vlaneseq
    %v725 = vshrl.u32 %v724, 7
    %v726 = vsub.s32 %v206, %v725
    %v727 = vrot.slane %v689, %v726
    %v728 = vlaneseq
    %v729 = vshrl.u32 %v728, 7
    %v730 = vsub.s32 %v206, %v729
    %v731 = vrot.slane %v691, %v730
    %v732 = vsel %vm239, %v707, %v703
    %v733 = vsel %vm241, %v711, %v732
    %v734 = vsel %vm243, %v715, %v733
    %v735 = vsel %vm245, %v719, %v734
    %v736 = vsel %vm247, %v723, %v735
    %v737 = vsel %vm249, %v727, %v736
    %v738 = vsel %vm251, %v731, %v737
    %v740 = vsel %vm254, %v738, -inf
    %741 = vmax.xlane.f32.xlu0 %v740
    %v742 = vpop.xlane.xlu0 %741
    %v744 = vlaneseq
    %v745 = vshrl.u32 %v744, 7
    %v746 = vsub.s32 0, %v745
    %v747 = vrot.slane %v742, %v746
    %v748 = vlaneseq
    %v749 = vshrl.u32 %v748, 7
    %v750 = vsub.s32 1, %v749
    %v751 = vrot.slane %v742, %v750
    %v752 = vlaneseq
    %v753 = vshrl.u32 %v752, 7
    %v754 = vsub.s32 2, %v753
    %v755 = vrot.slane %v742, %v754
    %v756 = vlaneseq
    %v757 = vshrl.u32 %v756, 7
    %v758 = vsub.s32 3, %v757
    %v759 = vrot.slane %v742, %v758
    %v760 = vlaneseq
    %v761 = vshrl.u32 %v760, 7
    %v762 = vsub.s32 4, %v761
    %v763 = vrot.slane %v742, %v762
    %v764 = vlaneseq
    %v765 = vshrl.u32 %v764, 7
    %v766 = vsub.s32 5, %v765
    %v767 = vrot.slane %v742, %v766
    %v768 = vlaneseq
    %v769 = vshrl.u32 %v768, 7
    %v770 = vsub.s32 6, %v769
    %v771 = vrot.slane %v742, %v770
    %v772 = vlaneseq
    %v773 = vshrl.u32 %v772, 7
    %v774 = vsub.s32 7, %v773
    %v775 = vrot.slane %v742, %v774
    %v784 = vsub.f32 %v677, %v747
    %v785 = vsub.f32 %v679, %v751
    %v786 = vsub.f32 %v681, %v755
    %v787 = vsub.f32 %v683, %v759
    %v788 = vsub.f32 %v685, %v763
    %v789 = vsub.f32 %v687, %v767
    %v790 = vsub.f32 %v689, %v771
    %v791 = vsub.f32 %v691, %v775
    %v792 = vmul.f32 %v784, 1.442695
    %v793 = vpow.pop %v792
    %v794 = vmul.f32 %v785, 1.442695
    %v795 = vpow.pop %v794
    %v796 = vmul.f32 %v786, 1.442695
    %v797 = vpow.pop %v796
    %v798 = vmul.f32 %v787, 1.442695
    %v799 = vpow.pop %v798
    %v800 = vmul.f32 %v788, 1.442695
    %v801 = vpow.pop %v800
    %v802 = vmul.f32 %v789, 1.442695
    %v803 = vpow.pop %v802
    %v804 = vmul.f32 %v790, 1.442695
    %v805 = vpow.pop %v804
    %v806 = vmul.f32 %v791, 1.442695
    %v807 = vpow.pop %v806
    %816 = vset.pattern.permute.xlu0 0
    %817 = vperm.xlu0 %816, %v793
    %v818 = vpop.permute.xlu0 %817
    %819 = vset.pattern.permute.xlu0 0
    %820 = vperm.xlu0 %819, %v795
    %v821 = vpop.permute.xlu0 %820
    %822 = vset.pattern.permute.xlu0 0
    %823 = vperm.xlu0 %822, %v797
    %v824 = vpop.permute.xlu0 %823
    %825 = vset.pattern.permute.xlu0 0
    %826 = vperm.xlu0 %825, %v799
    %v827 = vpop.permute.xlu0 %826
    %828 = vset.pattern.permute.xlu0 0
    %829 = vperm.xlu0 %828, %v801
    %v830 = vpop.permute.xlu0 %829
    %831 = vset.pattern.permute.xlu0 0
    %832 = vperm.xlu0 %831, %v803
    %v833 = vpop.permute.xlu0 %832
    %834 = vset.pattern.permute.xlu0 0
    %835 = vperm.xlu0 %834, %v805
    %v836 = vpop.permute.xlu0 %835
    %837 = vset.pattern.permute.xlu0 0
    %838 = vperm.xlu0 %837, %v807
    %v839 = vpop.permute.xlu0 %838
    %v840 = vlaneseq
    %v841 = vshrl.u32 %v840, 7
    %v842 = vsub.s32 %v206, %v841
    %v843 = vrot.slane %v818, %v842
    %v844 = vlaneseq
    %v845 = vshrl.u32 %v844, 7
    %v846 = vsub.s32 %v206, %v845
    %v847 = vrot.slane %v821, %v846
    %v848 = vlaneseq
    %v849 = vshrl.u32 %v848, 7
    %v850 = vsub.s32 %v206, %v849
    %v851 = vrot.slane %v824, %v850
    %v852 = vlaneseq
    %v853 = vshrl.u32 %v852, 7
    %v854 = vsub.s32 %v206, %v853
    %v855 = vrot.slane %v827, %v854
    %v856 = vlaneseq
    %v857 = vshrl.u32 %v856, 7
    %v858 = vsub.s32 %v206, %v857
    %v859 = vrot.slane %v830, %v858
    %v860 = vlaneseq
    %v861 = vshrl.u32 %v860, 7
    %v862 = vsub.s32 %v206, %v861
    %v863 = vrot.slane %v833, %v862
    %v864 = vlaneseq
    %v865 = vshrl.u32 %v864, 7
    %v866 = vsub.s32 %v206, %v865
    %v867 = vrot.slane %v836, %v866
    %v868 = vlaneseq
    %v869 = vshrl.u32 %v868, 7
    %v870 = vsub.s32 %v206, %v869
    %v871 = vrot.slane %v839, %v870
    %v872 = vsel %vm239, %v847, %v843
    %v873 = vsel %vm241, %v851, %v872
    %v874 = vsel %vm243, %v855, %v873
    %v875 = vsel %vm245, %v859, %v874
    %v876 = vsel %vm247, %v863, %v875
    %v877 = vsel %vm249, %v867, %v876
    %v878 = vsel %vm251, %v871, %v877
    %v880 = vsel %vm254, %v878, 0.0
    %881 = vadd.xlane.f32.xlu0 %v880
    %v882 = vpop.xlane.xlu0 %881
    %v884 = vlaneseq
    %v885 = vshrl.u32 %v884, 7
    %v886 = vsub.s32 0, %v885
    %v887 = vrot.slane %v882, %v886
    %v888 = vlaneseq
    %v889 = vshrl.u32 %v888, 7
    %v890 = vsub.s32 1, %v889
    %v891 = vrot.slane %v882, %v890
    %v892 = vlaneseq
    %v893 = vshrl.u32 %v892, 7
    %v894 = vsub.s32 2, %v893
    %v895 = vrot.slane %v882, %v894
    %v896 = vlaneseq
    %v897 = vshrl.u32 %v896, 7
    %v898 = vsub.s32 3, %v897
    %v899 = vrot.slane %v882, %v898
    %v900 = vlaneseq
    %v901 = vshrl.u32 %v900, 7
    %v902 = vsub.s32 4, %v901
    %v903 = vrot.slane %v882, %v902
    %v904 = vlaneseq
    %v905 = vshrl.u32 %v904, 7
    %v906 = vsub.s32 5, %v905
    %v907 = vrot.slane %v882, %v906
    %v908 = vlaneseq
    %v909 = vshrl.u32 %v908, 7
    %v910 = vsub.s32 6, %v909
    %v911 = vrot.slane %v882, %v910
    %v912 = vlaneseq
    %v913 = vshrl.u32 %v912, 7
    %v914 = vsub.s32 7, %v913
    %v915 = vrot.slane %v882, %v914
    %v924 = vrcp.pop %v887
    %v925 = vmul.f32 %v793, %v924
    %v926 = vrcp.pop %v891
    %v927 = vmul.f32 %v795, %v926
    %v928 = vrcp.pop %v895
    %v929 = vmul.f32 %v797, %v928
    %v930 = vrcp.pop %v899
    %v931 = vmul.f32 %v799, %v930
    %v932 = vrcp.pop %v903
    %v933 = vmul.f32 %v801, %v932
    %v934 = vrcp.pop %v907
    %v935 = vmul.f32 %v803, %v934
    %v936 = vrcp.pop %v911
    %v937 = vmul.f32 %v805, %v936
    %v938 = vrcp.pop %v915
    %v939 = vmul.f32 %v807, %v938
    %948 = vset.pattern.permute.xlu0 0
    %949 = vperm.xlu0 %948, %v925
    %v950 = vpop.permute.xlu0 %949
    %951 = vset.pattern.permute.xlu0 0
    %952 = vperm.xlu0 %951, %v927
    %v953 = vpop.permute.xlu0 %952
    %954 = vset.pattern.permute.xlu0 0
    %955 = vperm.xlu0 %954, %v929
    %v956 = vpop.permute.xlu0 %955
    %957 = vset.pattern.permute.xlu0 0
    %958 = vperm.xlu0 %957, %v931
    %v959 = vpop.permute.xlu0 %958
    %960 = vset.pattern.permute.xlu0 0
    %961 = vperm.xlu0 %960, %v933
    %v962 = vpop.permute.xlu0 %961
    %963 = vset.pattern.permute.xlu0 0
    %964 = vperm.xlu0 %963, %v935
    %v965 = vpop.permute.xlu0 %964
    %966 = vset.pattern.permute.xlu0 0
    %967 = vperm.xlu0 %966, %v937
    %v968 = vpop.permute.xlu0 %967
    %969 = vset.pattern.permute.xlu0 0
    %970 = vperm.xlu0 %969, %v939
    %v971 = vpop.permute.xlu0 %970
    %v972 = vlaneseq
    %v973 = vshrl.u32 %v972, 7
    %v974 = vsub.s32 %v206, %v973
    %v975 = vrot.slane %v950, %v974
    %v976 = vlaneseq
    %v977 = vshrl.u32 %v976, 7
    %v978 = vsub.s32 %v206, %v977
    %v979 = vrot.slane %v953, %v978
    %v980 = vlaneseq
    %v981 = vshrl.u32 %v980, 7
    %v982 = vsub.s32 %v206, %v981
    %v983 = vrot.slane %v956, %v982
    %v984 = vlaneseq
    %v985 = vshrl.u32 %v984, 7
    %v986 = vsub.s32 %v206, %v985
    %v987 = vrot.slane %v959, %v986
    %v988 = vlaneseq
    %v989 = vshrl.u32 %v988, 7
    %v990 = vsub.s32 %v206, %v989
    %v991 = vrot.slane %v962, %v990
    %v992 = vlaneseq
    %v993 = vshrl.u32 %v992, 7
    %v994 = vsub.s32 %v206, %v993
    %v995 = vrot.slane %v965, %v994
    %v996 = vlaneseq
    %v997 = vshrl.u32 %v996, 7
    %v998 = vsub.s32 %v206, %v997
    %v999 = vrot.slane %v968, %v998
    %v1000 = vlaneseq
    %v1001 = vshrl.u32 %v1000, 7
    %v1002 = vsub.s32 %v206, %v1001
    %v1003 = vrot.slane %v971, %v1002
    %v1004 = vsel %vm239, %v979, %v975
    %v1005 = vsel %vm241, %v983, %v1004
    %v1006 = vsel %vm243, %v987, %v1005
    %v1007 = vsel %vm245, %v991, %v1006
    %v1008 = vsel %vm247, %v995, %v1007
    %v1009 = vsel %vm249, %v999, %v1008
    %v1010 = vsel %vm251, %v1003, %v1009
    %s1012 = scalar_lea.vmem [#allocation5], 8
    %1013 = vst.msk [vmem:[%s1012] sm:$0xff] %vm254, %v1010
    %s1014 = scalar_lea.vmem [#allocation2], 16
    %v1015 = vld [vmem:[%s1014] sm:$0xff]
    %v1017 = vcombine.high %v1015, %v1015
    %v1019 = vunpack.c.l.s4 1966171168
    %v1020 = vunpack.c.0.s8 %v1019
    %v1021 = vlaneseq
    %v1022 = vshrl.u32 %v1021, 7
    %v1023 = vsub.s32 %v1020, %v1022
    %v1024 = vrot.slane %v1015, %v1023
    %v1026 = vunpack.c.l.s4 1966171168
    %v1027 = vunpack.c.0.s8 %v1026
    %v1028 = vlaneseq
    %v1029 = vshrl.u32 %v1028, 7
    %v1030 = vsub.s32 %v1027, %v1029
    %v1031 = vrot.slane %v1017, %v1030
    %v1032 = vcombine.high %v1024, %v1024
    %v1033 = vcombine.high %v1031, %v1031
    %v1035 = vunpack.c.l.s4 1966171168
    %v1036 = vunpack.c.0.s8 %v1035
    %v1037 = vlaneseq
    %v1038 = vshrl.u32 %v1037, 7
    %v1039 = vsub.s32 %v1036, %v1038
    %v1040 = vrot.slane %v1024, %v1039
    %v1042 = vunpack.c.l.s4 1966171168
    %v1043 = vunpack.c.0.s8 %v1042
    %v1044 = vlaneseq
    %v1045 = vshrl.u32 %v1044, 7
    %v1046 = vsub.s32 %v1043, %v1045
    %v1047 = vrot.slane %v1031, %v1046
    %v1049 = vunpack.c.l.s4 1966171168
    %v1050 = vunpack.c.0.s8 %v1049
    %v1051 = vlaneseq
    %v1052 = vshrl.u32 %v1051, 7
    %v1053 = vsub.s32 %v1050, %v1052
    %v1054 = vrot.slane %v1032, %v1053
    %v1056 = vunpack.c.l.s4 1966171168
    %v1057 = vunpack.c.0.s8 %v1056
    %v1058 = vlaneseq
    %v1059 = vshrl.u32 %v1058, 7
    %v1060 = vsub.s32 %v1057, %v1059
    %v1061 = vrot.slane %v1033, %v1060
    %v1062 = vcombine.high %v1040, %v1040
    %v1063 = vcombine.high %v1047, %v1047
    %v1064 = vcombine.high %v1054, %v1054
    %v1065 = vcombine.high %v1061, %v1061
    %v1066 = vlaneseq
    %v1067 = vshrl.u32 %v1066, 7
    %v1068 = vsub.s32 0, %v1067
    %v1069 = vrot.slane %v1040, %v1068
    %v1070 = vlaneseq
    %v1071 = vshrl.u32 %v1070, 7
    %v1072 = vsub.s32 0, %v1071
    %v1073 = vrot.slane %v1054, %v1072
    %v1074 = vlaneseq
    %v1075 = vshrl.u32 %v1074, 7
    %v1076 = vsub.s32 0, %v1075
    %v1077 = vrot.slane %v1062, %v1076
    %v1078 = vlaneseq
    %v1079 = vshrl.u32 %v1078, 7
    %v1080 = vsub.s32 0, %v1079
    %v1081 = vrot.slane %v1064, %v1080
    %v1082 = vlaneseq
    %v1083 = vshrl.u32 %v1082, 7
    %v1084 = vsub.s32 0, %v1083
    %v1085 = vrot.slane %v1047, %v1084
    %v1086 = vlaneseq
    %v1087 = vshrl.u32 %v1086, 7
    %v1088 = vsub.s32 0, %v1087
    %v1089 = vrot.slane %v1061, %v1088
    %v1090 = vlaneseq
    %v1091 = vshrl.u32 %v1090, 7
    %v1092 = vsub.s32 0, %v1091
    %v1093 = vrot.slane %v1063, %v1092
    %v1094 = vlaneseq
    %v1095 = vshrl.u32 %v1094, 7
    %v1096 = vsub.s32 0, %v1095
    %v1097 = vrot.slane %v1065, %v1096
    %v1106 = vsub.f32 %v1069, %v1015
    %v1107 = vsub.f32 %v1073, %v1015
    %v1108 = vsub.f32 %v1077, %v1015
    %v1109 = vsub.f32 %v1081, %v1015
    %v1110 = vsub.f32 %v1085, %v1015
    %v1111 = vsub.f32 %v1089, %v1015
    %v1112 = vsub.f32 %v1093, %v1015
    %v1113 = vsub.f32 %v1097, %v1015
    %v1114 = vand.u32 2147483647, %v1106
    %v1115 = vand.u32 2147483647, %v1107
    %v1116 = vand.u32 2147483647, %v1108
    %v1117 = vand.u32 2147483647, %v1109
    %v1118 = vand.u32 2147483647, %v1110
    %v1119 = vand.u32 2147483647, %v1111
    %v1120 = vand.u32 2147483647, %v1112
    %v1121 = vand.u32 2147483647, %v1113
    %v1122 = vmul.f32 %v1114, %v31
    %v1123 = vmul.f32 %v1115, %v31
    %v1124 = vmul.f32 %v1116, %v31
    %v1125 = vmul.f32 %v1117, %v31
    %v1126 = vmul.f32 %v1118, %v31
    %v1127 = vmul.f32 %v1119, %v31
    %v1128 = vmul.f32 %v1120, %v31
    %v1129 = vmul.f32 %v1121, %v31
    %v1130 = vsel %vm148, %v1122, 0.0
    %1131 = vadd.xlane.f32.xlu0 %v1130
    %v1132 = vpop.xlane.xlu0 %1131
    %v1133 = vsel %vm148, %v1123, 0.0
    %1134 = vadd.xlane.f32.xlu0 %v1133
    %v1135 = vpop.xlane.xlu0 %1134
    %v1136 = vsel %vm148, %v1124, 0.0
    %1137 = vadd.xlane.f32.xlu0 %v1136
    %v1138 = vpop.xlane.xlu0 %1137
    %v1139 = vsel %vm148, %v1125, 0.0
    %1140 = vadd.xlane.f32.xlu0 %v1139
    %v1141 = vpop.xlane.xlu0 %1140
    %v1142 = vsel %vm148, %v1126, 0.0
    %1143 = vadd.xlane.f32.xlu0 %v1142
    %v1144 = vpop.xlane.xlu0 %1143
    %v1145 = vsel %vm148, %v1127, 0.0
    %1146 = vadd.xlane.f32.xlu0 %v1145
    %v1147 = vpop.xlane.xlu0 %1146
    %v1148 = vsel %vm148, %v1128, 0.0
    %1149 = vadd.xlane.f32.xlu0 %v1148
    %v1150 = vpop.xlane.xlu0 %1149
    %v1151 = vsel %vm148, %v1129, 0.0
    %1152 = vadd.xlane.f32.xlu0 %v1151
    %v1153 = vpop.xlane.xlu0 %1152
    %v1154 = vmax.f32 %v1132, 0.0
    %v1155 = vmax.f32 %v1135, 0.0
    %v1156 = vmax.f32 %v1138, 0.0
    %v1157 = vmax.f32 %v1141, 0.0
    %v1158 = vmax.f32 %v1144, 0.0
    %v1159 = vmax.f32 %v1147, 0.0
    %v1160 = vmax.f32 %v1150, 0.0
    %v1161 = vmax.f32 %v1153, 0.0
    %v1162 = vmul.f32 %v1154, 1.442695
    %v1163 = vpow.pop %v1162
    %v1164 = vmul.f32 %v1155, 1.442695
    %v1165 = vpow.pop %v1164
    %v1166 = vmul.f32 %v1156, 1.442695
    %v1167 = vpow.pop %v1166
    %v1168 = vmul.f32 %v1157, 1.442695
    %v1169 = vpow.pop %v1168
    %v1170 = vmul.f32 %v1158, 1.442695
    %v1171 = vpow.pop %v1170
    %v1172 = vmul.f32 %v1159, 1.442695
    %v1173 = vpow.pop %v1172
    %v1174 = vmul.f32 %v1160, 1.442695
    %v1175 = vpow.pop %v1174
    %v1176 = vmul.f32 %v1161, 1.442695
    %v1177 = vpow.pop %v1176
    %v1186 = vlaneseq
    %v1187 = vshrl.u32 %v1186, 7
    %v1188 = vsub.s32 %v206, %v1187
    %v1189 = vrot.slane %v1163, %v1188
    %v1190 = vlaneseq
    %v1191 = vshrl.u32 %v1190, 7
    %v1192 = vsub.s32 %v206, %v1191
    %v1193 = vrot.slane %v1165, %v1192
    %v1194 = vlaneseq
    %v1195 = vshrl.u32 %v1194, 7
    %v1196 = vsub.s32 %v206, %v1195
    %v1197 = vrot.slane %v1167, %v1196
    %v1198 = vlaneseq
    %v1199 = vshrl.u32 %v1198, 7
    %v1200 = vsub.s32 %v206, %v1199
    %v1201 = vrot.slane %v1169, %v1200
    %v1202 = vlaneseq
    %v1203 = vshrl.u32 %v1202, 7
    %v1204 = vsub.s32 %v206, %v1203
    %v1205 = vrot.slane %v1171, %v1204
    %v1206 = vlaneseq
    %v1207 = vshrl.u32 %v1206, 7
    %v1208 = vsub.s32 %v206, %v1207
    %v1209 = vrot.slane %v1173, %v1208
    %v1210 = vlaneseq
    %v1211 = vshrl.u32 %v1210, 7
    %v1212 = vsub.s32 %v206, %v1211
    %v1213 = vrot.slane %v1175, %v1212
    %v1214 = vlaneseq
    %v1215 = vshrl.u32 %v1214, 7
    %v1216 = vsub.s32 %v206, %v1215
    %v1217 = vrot.slane %v1177, %v1216
    %v1218 = vsel %vm239, %v1193, %v1189
    %v1219 = vsel %vm241, %v1197, %v1218
    %v1220 = vsel %vm243, %v1201, %v1219
    %v1221 = vsel %vm245, %v1205, %v1220
    %v1222 = vsel %vm247, %v1209, %v1221
    %v1223 = vsel %vm249, %v1213, %v1222
    %v1224 = vsel %vm251, %v1217, %v1223
    %v1226 = vsel %vm254, %v1224, -inf
    %1227 = vmax.xlane.f32.xlu0 %v1226
    %v1228 = vpop.xlane.xlu0 %1227
    %v1230 = vlaneseq
    %v1231 = vshrl.u32 %v1230, 7
    %v1232 = vsub.s32 0, %v1231
    %v1233 = vrot.slane %v1228, %v1232
    %v1234 = vlaneseq
    %v1235 = vshrl.u32 %v1234, 7
    %v1236 = vsub.s32 1, %v1235
    %v1237 = vrot.slane %v1228, %v1236
    %v1238 = vlaneseq
    %v1239 = vshrl.u32 %v1238, 7
    %v1240 = vsub.s32 2, %v1239
    %v1241 = vrot.slane %v1228, %v1240
    %v1242 = vlaneseq
    %v1243 = vshrl.u32 %v1242, 7
    %v1244 = vsub.s32 3, %v1243
    %v1245 = vrot.slane %v1228, %v1244
    %v1246 = vlaneseq
    %v1247 = vshrl.u32 %v1246, 7
    %v1248 = vsub.s32 4, %v1247
    %v1249 = vrot.slane %v1228, %v1248
    %v1250 = vlaneseq
    %v1251 = vshrl.u32 %v1250, 7
    %v1252 = vsub.s32 5, %v1251
    %v1253 = vrot.slane %v1228, %v1252
    %v1254 = vlaneseq
    %v1255 = vshrl.u32 %v1254, 7
    %v1256 = vsub.s32 6, %v1255
    %v1257 = vrot.slane %v1228, %v1256
    %v1258 = vlaneseq
    %v1259 = vshrl.u32 %v1258, 7
    %v1260 = vsub.s32 7, %v1259
    %v1261 = vrot.slane %v1228, %v1260
    %v1270 = vsub.f32 %v1163, %v1233
    %v1271 = vsub.f32 %v1165, %v1237
    %v1272 = vsub.f32 %v1167, %v1241
    %v1273 = vsub.f32 %v1169, %v1245
    %v1274 = vsub.f32 %v1171, %v1249
    %v1275 = vsub.f32 %v1173, %v1253
    %v1276 = vsub.f32 %v1175, %v1257
    %v1277 = vsub.f32 %v1177, %v1261
    %v1278 = vmul.f32 %v1270, 1.442695
    %v1279 = vpow.pop %v1278
    %v1280 = vmul.f32 %v1271, 1.442695
    %v1281 = vpow.pop %v1280
    %v1282 = vmul.f32 %v1272, 1.442695
    %v1283 = vpow.pop %v1282
    %v1284 = vmul.f32 %v1273, 1.442695
    %v1285 = vpow.pop %v1284
    %v1286 = vmul.f32 %v1274, 1.442695
    %v1287 = vpow.pop %v1286
    %v1288 = vmul.f32 %v1275, 1.442695
    %v1289 = vpow.pop %v1288
    %v1290 = vmul.f32 %v1276, 1.442695
    %v1291 = vpow.pop %v1290
    %v1292 = vmul.f32 %v1277, 1.442695
    %v1293 = vpow.pop %v1292
    %1302 = vset.pattern.permute.xlu0 0
    %1303 = vperm.xlu0 %1302, %v1279
    %v1304 = vpop.permute.xlu0 %1303
    %1305 = vset.pattern.permute.xlu0 0
    %1306 = vperm.xlu0 %1305, %v1281
    %v1307 = vpop.permute.xlu0 %1306
    %1308 = vset.pattern.permute.xlu0 0
    %1309 = vperm.xlu0 %1308, %v1283
    %v1310 = vpop.permute.xlu0 %1309
    %1311 = vset.pattern.permute.xlu0 0
    %1312 = vperm.xlu0 %1311, %v1285
    %v1313 = vpop.permute.xlu0 %1312
    %1314 = vset.pattern.permute.xlu0 0
    %1315 = vperm.xlu0 %1314, %v1287
    %v1316 = vpop.permute.xlu0 %1315
    %1317 = vset.pattern.permute.xlu0 0
    %1318 = vperm.xlu0 %1317, %v1289
    %v1319 = vpop.permute.xlu0 %1318
    %1320 = vset.pattern.permute.xlu0 0
    %1321 = vperm.xlu0 %1320, %v1291
    %v1322 = vpop.permute.xlu0 %1321
    %1323 = vset.pattern.permute.xlu0 0
    %1324 = vperm.xlu0 %1323, %v1293
    %v1325 = vpop.permute.xlu0 %1324
    %v1326 = vlaneseq
    %v1327 = vshrl.u32 %v1326, 7
    %v1328 = vsub.s32 %v206, %v1327
    %v1329 = vrot.slane %v1304, %v1328
    %v1330 = vlaneseq
    %v1331 = vshrl.u32 %v1330, 7
    %v1332 = vsub.s32 %v206, %v1331
    %v1333 = vrot.slane %v1307, %v1332
    %v1334 = vlaneseq
    %v1335 = vshrl.u32 %v1334, 7
    %v1336 = vsub.s32 %v206, %v1335
    %v1337 = vrot.slane %v1310, %v1336
    %v1338 = vlaneseq
    %v1339 = vshrl.u32 %v1338, 7
    %v1340 = vsub.s32 %v206, %v1339
    %v1341 = vrot.slane %v1313, %v1340
    %v1342 = vlaneseq
    %v1343 = vshrl.u32 %v1342, 7
    %v1344 = vsub.s32 %v206, %v1343
    %v1345 = vrot.slane %v1316, %v1344
    %v1346 = vlaneseq
    %v1347 = vshrl.u32 %v1346, 7
    %v1348 = vsub.s32 %v206, %v1347
    %v1349 = vrot.slane %v1319, %v1348
    %v1350 = vlaneseq
    %v1351 = vshrl.u32 %v1350, 7
    %v1352 = vsub.s32 %v206, %v1351
    %v1353 = vrot.slane %v1322, %v1352
    %v1354 = vlaneseq
    %v1355 = vshrl.u32 %v1354, 7
    %v1356 = vsub.s32 %v206, %v1355
    %v1357 = vrot.slane %v1325, %v1356
    %v1358 = vsel %vm239, %v1333, %v1329
    %v1359 = vsel %vm241, %v1337, %v1358
    %v1360 = vsel %vm243, %v1341, %v1359
    %v1361 = vsel %vm245, %v1345, %v1360
    %v1362 = vsel %vm247, %v1349, %v1361
    %v1363 = vsel %vm249, %v1353, %v1362
    %v1364 = vsel %vm251, %v1357, %v1363
    %v1366 = vsel %vm254, %v1364, 0.0
    %1367 = vadd.xlane.f32.xlu0 %v1366
    %v1368 = vpop.xlane.xlu0 %1367
    %v1370 = vlaneseq
    %v1371 = vshrl.u32 %v1370, 7
    %v1372 = vsub.s32 0, %v1371
    %v1373 = vrot.slane %v1368, %v1372
    %v1374 = vlaneseq
    %v1375 = vshrl.u32 %v1374, 7
    %v1376 = vsub.s32 1, %v1375
    %v1377 = vrot.slane %v1368, %v1376
    %v1378 = vlaneseq
    %v1379 = vshrl.u32 %v1378, 7
    %v1380 = vsub.s32 2, %v1379
    %v1381 = vrot.slane %v1368, %v1380
    %v1382 = vlaneseq
    %v1383 = vshrl.u32 %v1382, 7
    %v1384 = vsub.s32 3, %v1383
    %v1385 = vrot.slane %v1368, %v1384
    %v1386 = vlaneseq
    %v1387 = vshrl.u32 %v1386, 7
    %v1388 = vsub.s32 4, %v1387
    %v1389 = vrot.slane %v1368, %v1388
    %v1390 = vlaneseq
    %v1391 = vshrl.u32 %v1390, 7
    %v1392 = vsub.s32 5, %v1391
    %v1393 = vrot.slane %v1368, %v1392
    %v1394 = vlaneseq
    %v1395 = vshrl.u32 %v1394, 7
    %v1396 = vsub.s32 6, %v1395
    %v1397 = vrot.slane %v1368, %v1396
    %v1398 = vlaneseq
    %v1399 = vshrl.u32 %v1398, 7
    %v1400 = vsub.s32 7, %v1399
    %v1401 = vrot.slane %v1368, %v1400
    %v1410 = vrcp.pop %v1373
    %v1411 = vmul.f32 %v1279, %v1410
    %v1412 = vrcp.pop %v1377
    %v1413 = vmul.f32 %v1281, %v1412
    %v1414 = vrcp.pop %v1381
    %v1415 = vmul.f32 %v1283, %v1414
    %v1416 = vrcp.pop %v1385
    %v1417 = vmul.f32 %v1285, %v1416
    %v1418 = vrcp.pop %v1389
    %v1419 = vmul.f32 %v1287, %v1418
    %v1420 = vrcp.pop %v1393
    %v1421 = vmul.f32 %v1289, %v1420
    %v1422 = vrcp.pop %v1397
    %v1423 = vmul.f32 %v1291, %v1422
    %v1424 = vrcp.pop %v1401
    %v1425 = vmul.f32 %v1293, %v1424
    %1434 = vset.pattern.permute.xlu0 0
    %1435 = vperm.xlu0 %1434, %v1411
    %v1436 = vpop.permute.xlu0 %1435
    %1437 = vset.pattern.permute.xlu0 0
    %1438 = vperm.xlu0 %1437, %v1413
    %v1439 = vpop.permute.xlu0 %1438
    %1440 = vset.pattern.permute.xlu0 0
    %1441 = vperm.xlu0 %1440, %v1415
    %v1442 = vpop.permute.xlu0 %1441
    %1443 = vset.pattern.permute.xlu0 0
    %1444 = vperm.xlu0 %1443, %v1417
    %v1445 = vpop.permute.xlu0 %1444
    %1446 = vset.pattern.permute.xlu0 0
    %1447 = vperm.xlu0 %1446, %v1419
    %v1448 = vpop.permute.xlu0 %1447
    %1449 = vset.pattern.permute.xlu0 0
    %1450 = vperm.xlu0 %1449, %v1421
    %v1451 = vpop.permute.xlu0 %1450
    %1452 = vset.pattern.permute.xlu0 0
    %1453 = vperm.xlu0 %1452, %v1423
    %v1454 = vpop.permute.xlu0 %1453
    %1455 = vset.pattern.permute.xlu0 0
    %1456 = vperm.xlu0 %1455, %v1425
    %v1457 = vpop.permute.xlu0 %1456
    %v1458 = vlaneseq
    %v1459 = vshrl.u32 %v1458, 7
    %v1460 = vsub.s32 %v206, %v1459
    %v1461 = vrot.slane %v1436, %v1460
    %v1462 = vlaneseq
    %v1463 = vshrl.u32 %v1462, 7
    %v1464 = vsub.s32 %v206, %v1463
    %v1465 = vrot.slane %v1439, %v1464
    %v1466 = vlaneseq
    %v1467 = vshrl.u32 %v1466, 7
    %v1468 = vsub.s32 %v206, %v1467
    %v1469 = vrot.slane %v1442, %v1468
    %v1470 = vlaneseq
    %v1471 = vshrl.u32 %v1470, 7
    %v1472 = vsub.s32 %v206, %v1471
    %v1473 = vrot.slane %v1445, %v1472
    %v1474 = vlaneseq
    %v1475 = vshrl.u32 %v1474, 7
    %v1476 = vsub.s32 %v206, %v1475
    %v1477 = vrot.slane %v1448, %v1476
    %v1478 = vlaneseq
    %v1479 = vshrl.u32 %v1478, 7
    %v1480 = vsub.s32 %v206, %v1479
    %v1481 = vrot.slane %v1451, %v1480
    %v1482 = vlaneseq
    %v1483 = vshrl.u32 %v1482, 7
    %v1484 = vsub.s32 %v206, %v1483
    %v1485 = vrot.slane %v1454, %v1484
    %v1486 = vlaneseq
    %v1487 = vshrl.u32 %v1486, 7
    %v1488 = vsub.s32 %v206, %v1487
    %v1489 = vrot.slane %v1457, %v1488
    %v1490 = vsel %vm239, %v1465, %v1461
    %v1491 = vsel %vm241, %v1469, %v1490
    %v1492 = vsel %vm243, %v1473, %v1491
    %v1493 = vsel %vm245, %v1477, %v1492
    %v1494 = vsel %vm247, %v1481, %v1493
    %v1495 = vsel %vm249, %v1485, %v1494
    %v1496 = vsel %vm251, %v1489, %v1495
    %s1498 = scalar_lea.vmem [#allocation5], 16
    %1499 = vst.msk [vmem:[%s1498] sm:$0xff] %vm254, %v1496
    %s1500 = scalar_lea.vmem [#allocation2], 24
    %v1501 = vld [vmem:[%s1500] sm:$0xff]
    %v1503 = vcombine.high %v1501, %v1501
    %v1505 = vunpack.c.l.s4 1966171168
    %v1506 = vunpack.c.0.s8 %v1505
    %v1507 = vlaneseq
    %v1508 = vshrl.u32 %v1507, 7
    %v1509 = vsub.s32 %v1506, %v1508
    %v1510 = vrot.slane %v1501, %v1509
    %v1512 = vunpack.c.l.s4 1966171168
    %v1513 = vunpack.c.0.s8 %v1512
    %v1514 = vlaneseq
    %v1515 = vshrl.u32 %v1514, 7
    %v1516 = vsub.s32 %v1513, %v1515
    %v1517 = vrot.slane %v1503, %v1516
    %v1518 = vcombine.high %v1510, %v1510
    %v1519 = vcombine.high %v1517, %v1517
    %v1521 = vunpack.c.l.s4 1966171168
    %v1522 = vunpack.c.0.s8 %v1521
    %v1523 = vlaneseq
    %v1524 = vshrl.u32 %v1523, 7
    %v1525 = vsub.s32 %v1522, %v1524
    %v1526 = vrot.slane %v1510, %v1525
    %v1528 = vunpack.c.l.s4 1966171168
    %v1529 = vunpack.c.0.s8 %v1528
    %v1530 = vlaneseq
    %v1531 = vshrl.u32 %v1530, 7
    %v1532 = vsub.s32 %v1529, %v1531
    %v1533 = vrot.slane %v1517, %v1532
    %v1535 = vunpack.c.l.s4 1966171168
    %v1536 = vunpack.c.0.s8 %v1535
    %v1537 = vlaneseq
    %v1538 = vshrl.u32 %v1537, 7
    %v1539 = vsub.s32 %v1536, %v1538
    %v1540 = vrot.slane %v1518, %v1539
    %v1542 = vunpack.c.l.s4 1966171168
    %v1543 = vunpack.c.0.s8 %v1542
    %v1544 = vlaneseq
    %v1545 = vshrl.u32 %v1544, 7
    %v1546 = vsub.s32 %v1543, %v1545
    %v1547 = vrot.slane %v1519, %v1546
    %v1548 = vcombine.high %v1526, %v1526
    %v1549 = vcombine.high %v1533, %v1533
    %v1550 = vcombine.high %v1540, %v1540
    %v1551 = vcombine.high %v1547, %v1547
    %v1552 = vlaneseq
    %v1553 = vshrl.u32 %v1552, 7
    %v1554 = vsub.s32 0, %v1553
    %v1555 = vrot.slane %v1526, %v1554
    %v1556 = vlaneseq
    %v1557 = vshrl.u32 %v1556, 7
    %v1558 = vsub.s32 0, %v1557
    %v1559 = vrot.slane %v1540, %v1558
    %v1560 = vlaneseq
    %v1561 = vshrl.u32 %v1560, 7
    %v1562 = vsub.s32 0, %v1561
    %v1563 = vrot.slane %v1548, %v1562
    %v1564 = vlaneseq
    %v1565 = vshrl.u32 %v1564, 7
    %v1566 = vsub.s32 0, %v1565
    %v1567 = vrot.slane %v1550, %v1566
    %v1568 = vlaneseq
    %v1569 = vshrl.u32 %v1568, 7
    %v1570 = vsub.s32 0, %v1569
    %v1571 = vrot.slane %v1533, %v1570
    %v1572 = vlaneseq
    %v1573 = vshrl.u32 %v1572, 7
    %v1574 = vsub.s32 0, %v1573
    %v1575 = vrot.slane %v1547, %v1574
    %v1576 = vlaneseq
    %v1577 = vshrl.u32 %v1576, 7
    %v1578 = vsub.s32 0, %v1577
    %v1579 = vrot.slane %v1549, %v1578
    %v1580 = vlaneseq
    %v1581 = vshrl.u32 %v1580, 7
    %v1582 = vsub.s32 0, %v1581
    %v1583 = vrot.slane %v1551, %v1582
    %v1592 = vsub.f32 %v1555, %v1501
    %v1593 = vsub.f32 %v1559, %v1501
    %v1594 = vsub.f32 %v1563, %v1501
    %v1595 = vsub.f32 %v1567, %v1501
    %v1596 = vsub.f32 %v1571, %v1501
    %v1597 = vsub.f32 %v1575, %v1501
    %v1598 = vsub.f32 %v1579, %v1501
    %v1599 = vsub.f32 %v1583, %v1501
    %v1600 = vand.u32 2147483647, %v1592
    %v1601 = vand.u32 2147483647, %v1593
    %v1602 = vand.u32 2147483647, %v1594
    %v1603 = vand.u32 2147483647, %v1595
    %v1604 = vand.u32 2147483647, %v1596
    %v1605 = vand.u32 2147483647, %v1597
    %v1606 = vand.u32 2147483647, %v1598
    %v1607 = vand.u32 2147483647, %v1599
    %v1608 = vmul.f32 %v1600, %v31
    %v1609 = vmul.f32 %v1601, %v31
    %v1610 = vmul.f32 %v1602, %v31
    %v1611 = vmul.f32 %v1603, %v31
    %v1612 = vmul.f32 %v1604, %v31
    %v1613 = vmul.f32 %v1605, %v31
    %v1614 = vmul.f32 %v1606, %v31
    %v1615 = vmul.f32 %v1607, %v31
    %v1616 = vsel %vm148, %v1608, 0.0
    %1617 = vadd.xlane.f32.xlu0 %v1616
    %v1618 = vpop.xlane.xlu0 %1617
    %v1619 = vsel %vm148, %v1609, 0.0
    %1620 = vadd.xlane.f32.xlu0 %v1619
    %v1621 = vpop.xlane.xlu0 %1620
    %v1622 = vsel %vm148, %v1610, 0.0
    %1623 = vadd.xlane.f32.xlu0 %v1622
    %v1624 = vpop.xlane.xlu0 %1623
    %v1625 = vsel %vm148, %v1611, 0.0
    %1626 = vadd.xlane.f32.xlu0 %v1625
    %v1627 = vpop.xlane.xlu0 %1626
    %v1628 = vsel %vm148, %v1612, 0.0
    %1629 = vadd.xlane.f32.xlu0 %v1628
    %v1630 = vpop.xlane.xlu0 %1629
    %v1631 = vsel %vm148, %v1613, 0.0
    %1632 = vadd.xlane.f32.xlu0 %v1631
    %v1633 = vpop.xlane.xlu0 %1632
    %v1634 = vsel %vm148, %v1614, 0.0
    %1635 = vadd.xlane.f32.xlu0 %v1634
    %v1636 = vpop.xlane.xlu0 %1635
    %v1637 = vsel %vm148, %v1615, 0.0
    %1638 = vadd.xlane.f32.xlu0 %v1637
    %v1639 = vpop.xlane.xlu0 %1638
    %v1640 = vmax.f32 %v1618, 0.0
    %v1641 = vmax.f32 %v1621, 0.0
    %v1642 = vmax.f32 %v1624, 0.0
    %v1643 = vmax.f32 %v1627, 0.0
    %v1644 = vmax.f32 %v1630, 0.0
    %v1645 = vmax.f32 %v1633, 0.0
    %v1646 = vmax.f32 %v1636, 0.0
    %v1647 = vmax.f32 %v1639, 0.0
    %v1648 = vmul.f32 %v1640, 1.442695
    %v1649 = vpow.pop %v1648
    %v1650 = vmul.f32 %v1641, 1.442695
    %v1651 = vpow.pop %v1650
    %v1652 = vmul.f32 %v1642, 1.442695
    %v1653 = vpow.pop %v1652
    %v1654 = vmul.f32 %v1643, 1.442695
    %v1655 = vpow.pop %v1654
    %v1656 = vmul.f32 %v1644, 1.442695
    %v1657 = vpow.pop %v1656
    %v1658 = vmul.f32 %v1645, 1.442695
    %v1659 = vpow.pop %v1658
    %v1660 = vmul.f32 %v1646, 1.442695
    %v1661 = vpow.pop %v1660
    %v1662 = vmul.f32 %v1647, 1.442695
    %v1663 = vpow.pop %v1662
    %v1672 = vlaneseq
    %v1673 = vshrl.u32 %v1672, 7
    %v1674 = vsub.s32 %v206, %v1673
    %v1675 = vrot.slane %v1649, %v1674
    %v1676 = vlaneseq
    %v1677 = vshrl.u32 %v1676, 7
    %v1678 = vsub.s32 %v206, %v1677
    %v1679 = vrot.slane %v1651, %v1678
    %v1680 = vlaneseq
    %v1681 = vshrl.u32 %v1680, 7
    %v1682 = vsub.s32 %v206, %v1681
    %v1683 = vrot.slane %v1653, %v1682
    %v1684 = vlaneseq
    %v1685 = vshrl.u32 %v1684, 7
    %v1686 = vsub.s32 %v206, %v1685
    %v1687 = vrot.slane %v1655, %v1686
    %v1688 = vlaneseq
    %v1689 = vshrl.u32 %v1688, 7
    %v1690 = vsub.s32 %v206, %v1689
    %v1691 = vrot.slane %v1657, %v1690
    %v1692 = vlaneseq
    %v1693 = vshrl.u32 %v1692, 7
    %v1694 = vsub.s32 %v206, %v1693
    %v1695 = vrot.slane %v1659, %v1694
    %v1696 = vlaneseq
    %v1697 = vshrl.u32 %v1696, 7
    %v1698 = vsub.s32 %v206, %v1697
    %v1699 = vrot.slane %v1661, %v1698
    %v1700 = vlaneseq
    %v1701 = vshrl.u32 %v1700, 7
    %v1702 = vsub.s32 %v206, %v1701
    %v1703 = vrot.slane %v1663, %v1702
    %v1704 = vsel %vm239, %v1679, %v1675
    %v1705 = vsel %vm241, %v1683, %v1704
    %v1706 = vsel %vm243, %v1687, %v1705
    %v1707 = vsel %vm245, %v1691, %v1706
    %v1708 = vsel %vm247, %v1695, %v1707
    %v1709 = vsel %vm249, %v1699, %v1708
    %v1710 = vsel %vm251, %v1703, %v1709
    %v1712 = vsel %vm254, %v1710, -inf
    %1713 = vmax.xlane.f32.xlu0 %v1712
    %v1714 = vpop.xlane.xlu0 %1713
    %v1716 = vlaneseq
    %v1717 = vshrl.u32 %v1716, 7
    %v1718 = vsub.s32 0, %v1717
    %v1719 = vrot.slane %v1714, %v1718
    %v1720 = vlaneseq
    %v1721 = vshrl.u32 %v1720, 7
    %v1722 = vsub.s32 1, %v1721
    %v1723 = vrot.slane %v1714, %v1722
    %v1724 = vlaneseq
    %v1725 = vshrl.u32 %v1724, 7
    %v1726 = vsub.s32 2, %v1725
    %v1727 = vrot.slane %v1714, %v1726
    %v1728 = vlaneseq
    %v1729 = vshrl.u32 %v1728, 7
    %v1730 = vsub.s32 3, %v1729
    %v1731 = vrot.slane %v1714, %v1730
    %v1732 = vlaneseq
    %v1733 = vshrl.u32 %v1732, 7
    %v1734 = vsub.s32 4, %v1733
    %v1735 = vrot.slane %v1714, %v1734
    %v1736 = vlaneseq
    %v1737 = vshrl.u32 %v1736, 7
    %v1738 = vsub.s32 5, %v1737
    %v1739 = vrot.slane %v1714, %v1738
    %v1740 = vlaneseq
    %v1741 = vshrl.u32 %v1740, 7
    %v1742 = vsub.s32 6, %v1741
    %v1743 = vrot.slane %v1714, %v1742
    %v1744 = vlaneseq
    %v1745 = vshrl.u32 %v1744, 7
    %v1746 = vsub.s32 7, %v1745
    %v1747 = vrot.slane %v1714, %v1746
    %v1756 = vsub.f32 %v1649, %v1719
    %v1757 = vsub.f32 %v1651, %v1723
    %v1758 = vsub.f32 %v1653, %v1727
    %v1759 = vsub.f32 %v1655, %v1731
    %v1760 = vsub.f32 %v1657, %v1735
    %v1761 = vsub.f32 %v1659, %v1739
    %v1762 = vsub.f32 %v1661, %v1743
    %v1763 = vsub.f32 %v1663, %v1747
    %v1764 = vmul.f32 %v1756, 1.442695
    %v1765 = vpow.pop %v1764
    %v1766 = vmul.f32 %v1757, 1.442695
    %v1767 = vpow.pop %v1766
    %v1768 = vmul.f32 %v1758, 1.442695
    %v1769 = vpow.pop %v1768
    %v1770 = vmul.f32 %v1759, 1.442695
    %v1771 = vpow.pop %v1770
    %v1772 = vmul.f32 %v1760, 1.442695
    %v1773 = vpow.pop %v1772
    %v1774 = vmul.f32 %v1761, 1.442695
    %v1775 = vpow.pop %v1774
    %v1776 = vmul.f32 %v1762, 1.442695
    %v1777 = vpow.pop %v1776
    %v1778 = vmul.f32 %v1763, 1.442695
    %v1779 = vpow.pop %v1778
    %1788 = vset.pattern.permute.xlu0 0
    %1789 = vperm.xlu0 %1788, %v1765
    %v1790 = vpop.permute.xlu0 %1789
    %1791 = vset.pattern.permute.xlu0 0
    %1792 = vperm.xlu0 %1791, %v1767
    %v1793 = vpop.permute.xlu0 %1792
    %1794 = vset.pattern.permute.xlu0 0
    %1795 = vperm.xlu0 %1794, %v1769
    %v1796 = vpop.permute.xlu0 %1795
    %1797 = vset.pattern.permute.xlu0 0
    %1798 = vperm.xlu0 %1797, %v1771
    %v1799 = vpop.permute.xlu0 %1798
    %1800 = vset.pattern.permute.xlu0 0
    %1801 = vperm.xlu0 %1800, %v1773
    %v1802 = vpop.permute.xlu0 %1801
    %1803 = vset.pattern.permute.xlu0 0
    %1804 = vperm.xlu0 %1803, %v1775
    %v1805 = vpop.permute.xlu0 %1804
    %1806 = vset.pattern.permute.xlu0 0
    %1807 = vperm.xlu0 %1806, %v1777
    %v1808 = vpop.permute.xlu0 %1807
    %1809 = vset.pattern.permute.xlu0 0
    %1810 = vperm.xlu0 %1809, %v1779
    %v1811 = vpop.permute.xlu0 %1810
    %v1812 = vlaneseq
    %v1813 = vshrl.u32 %v1812, 7
    %v1814 = vsub.s32 %v206, %v1813
    %v1815 = vrot.slane %v1790, %v1814
    %v1816 = vlaneseq
    %v1817 = vshrl.u32 %v1816, 7
    %v1818 = vsub.s32 %v206, %v1817
    %v1819 = vrot.slane %v1793, %v1818
    %v1820 = vlaneseq
    %v1821 = vshrl.u32 %v1820, 7
    %v1822 = vsub.s32 %v206, %v1821
    %v1823 = vrot.slane %v1796, %v1822
    %v1824 = vlaneseq
    %v1825 = vshrl.u32 %v1824, 7
    %v1826 = vsub.s32 %v206, %v1825
    %v1827 = vrot.slane %v1799, %v1826
    %v1828 = vlaneseq
    %v1829 = vshrl.u32 %v1828, 7
    %v1830 = vsub.s32 %v206, %v1829
    %v1831 = vrot.slane %v1802, %v1830
    %v1832 = vlaneseq
    %v1833 = vshrl.u32 %v1832, 7
    %v1834 = vsub.s32 %v206, %v1833
    %v1835 = vrot.slane %v1805, %v1834
    %v1836 = vlaneseq
    %v1837 = vshrl.u32 %v1836, 7
    %v1838 = vsub.s32 %v206, %v1837
    %v1839 = vrot.slane %v1808, %v1838
    %v1840 = vlaneseq
    %v1841 = vshrl.u32 %v1840, 7
    %v1842 = vsub.s32 %v206, %v1841
    %v1843 = vrot.slane %v1811, %v1842
    %v1844 = vsel %vm239, %v1819, %v1815
    %v1845 = vsel %vm241, %v1823, %v1844
    %v1846 = vsel %vm243, %v1827, %v1845
    %v1847 = vsel %vm245, %v1831, %v1846
    %v1848 = vsel %vm247, %v1835, %v1847
    %v1849 = vsel %vm249, %v1839, %v1848
    %v1850 = vsel %vm251, %v1843, %v1849
    %v1852 = vsel %vm254, %v1850, 0.0
    %1853 = vadd.xlane.f32.xlu0 %v1852
    %v1854 = vpop.xlane.xlu0 %1853
    %v1856 = vlaneseq
    %v1857 = vshrl.u32 %v1856, 7
    %v1858 = vsub.s32 0, %v1857
    %v1859 = vrot.slane %v1854, %v1858
    %v1860 = vlaneseq
    %v1861 = vshrl.u32 %v1860, 7
    %v1862 = vsub.s32 1, %v1861
    %v1863 = vrot.slane %v1854, %v1862
    %v1864 = vlaneseq
    %v1865 = vshrl.u32 %v1864, 7
    %v1866 = vsub.s32 2, %v1865
    %v1867 = vrot.slane %v1854, %v1866
    %v1868 = vlaneseq
    %v1869 = vshrl.u32 %v1868, 7
    %v1870 = vsub.s32 3, %v1869
    %v1871 = vrot.slane %v1854, %v1870
    %v1872 = vlaneseq
    %v1873 = vshrl.u32 %v1872, 7
    %v1874 = vsub.s32 4, %v1873
    %v1875 = vrot.slane %v1854, %v1874
    %v1876 = vlaneseq
    %v1877 = vshrl.u32 %v1876, 7
    %v1878 = vsub.s32 5, %v1877
    %v1879 = vrot.slane %v1854, %v1878
    %v1880 = vlaneseq
    %v1881 = vshrl.u32 %v1880, 7
    %v1882 = vsub.s32 6, %v1881
    %v1883 = vrot.slane %v1854, %v1882
    %v1884 = vlaneseq
    %v1885 = vshrl.u32 %v1884, 7
    %v1886 = vsub.s32 7, %v1885
    %v1887 = vrot.slane %v1854, %v1886
    %v1896 = vrcp.pop %v1859
    %v1897 = vmul.f32 %v1765, %v1896
    %v1898 = vrcp.pop %v1863
    %v1899 = vmul.f32 %v1767, %v1898
    %v1900 = vrcp.pop %v1867
    %v1901 = vmul.f32 %v1769, %v1900
    %v1902 = vrcp.pop %v1871
    %v1903 = vmul.f32 %v1771, %v1902
    %v1904 = vrcp.pop %v1875
    %v1905 = vmul.f32 %v1773, %v1904
    %v1906 = vrcp.pop %v1879
    %v1907 = vmul.f32 %v1775, %v1906
    %v1908 = vrcp.pop %v1883
    %v1909 = vmul.f32 %v1777, %v1908
    %v1910 = vrcp.pop %v1887
    %v1911 = vmul.f32 %v1779, %v1910
    %1920 = vset.pattern.permute.xlu0 0
    %1921 = vperm.xlu0 %1920, %v1897
    %v1922 = vpop.permute.xlu0 %1921
    %1923 = vset.pattern.permute.xlu0 0
    %1924 = vperm.xlu0 %1923, %v1899
    %v1925 = vpop.permute.xlu0 %1924
    %1926 = vset.pattern.permute.xlu0 0
    %1927 = vperm.xlu0 %1926, %v1901
    %v1928 = vpop.permute.xlu0 %1927
    %1929 = vset.pattern.permute.xlu0 0
    %1930 = vperm.xlu0 %1929, %v1903
    %v1931 = vpop.permute.xlu0 %1930
    %1932 = vset.pattern.permute.xlu0 0
    %1933 = vperm.xlu0 %1932, %v1905
    %v1934 = vpop.permute.xlu0 %1933
    %1935 = vset.pattern.permute.xlu0 0
    %1936 = vperm.xlu0 %1935, %v1907
    %v1937 = vpop.permute.xlu0 %1936
    %1938 = vset.pattern.permute.xlu0 0
    %1939 = vperm.xlu0 %1938, %v1909
    %v1940 = vpop.permute.xlu0 %1939
    %1941 = vset.pattern.permute.xlu0 0
    %1942 = vperm.xlu0 %1941, %v1911
    %v1943 = vpop.permute.xlu0 %1942
    %v1944 = vlaneseq
    %v1945 = vshrl.u32 %v1944, 7
    %v1946 = vsub.s32 %v206, %v1945
    %v1947 = vrot.slane %v1922, %v1946
    %v1948 = vlaneseq
    %v1949 = vshrl.u32 %v1948, 7
    %v1950 = vsub.s32 %v206, %v1949
    %v1951 = vrot.slane %v1925, %v1950
    %v1952 = vlaneseq
    %v1953 = vshrl.u32 %v1952, 7
    %v1954 = vsub.s32 %v206, %v1953
    %v1955 = vrot.slane %v1928, %v1954
    %v1956 = vlaneseq
    %v1957 = vshrl.u32 %v1956, 7
    %v1958 = vsub.s32 %v206, %v1957
    %v1959 = vrot.slane %v1931, %v1958
    %v1960 = vlaneseq
    %v1961 = vshrl.u32 %v1960, 7
    %v1962 = vsub.s32 %v206, %v1961
    %v1963 = vrot.slane %v1934, %v1962
    %v1964 = vlaneseq
    %v1965 = vshrl.u32 %v1964, 7
    %v1966 = vsub.s32 %v206, %v1965
    %v1967 = vrot.slane %v1937, %v1966
    %v1968 = vlaneseq
    %v1969 = vshrl.u32 %v1968, 7
    %v1970 = vsub.s32 %v206, %v1969
    %v1971 = vrot.slane %v1940, %v1970
    %v1972 = vlaneseq
    %v1973 = vshrl.u32 %v1972, 7
    %v1974 = vsub.s32 %v206, %v1973
    %v1975 = vrot.slane %v1943, %v1974
    %v1976 = vsel %vm239, %v1951, %v1947
    %v1977 = vsel %vm241, %v1955, %v1976
    %v1978 = vsel %vm243, %v1959, %v1977
    %v1979 = vsel %vm245, %v1963, %v1978
    %v1980 = vsel %vm247, %v1967, %v1979
    %v1981 = vsel %vm249, %v1971, %v1980
    %v1982 = vsel %vm251, %v1975, %v1981
    %s1984 = scalar_lea.vmem [#allocation5], 24
    %1985 = vst.msk [vmem:[%s1984] sm:$0xff] %vm254, %v1982
    // Predicated region
    $region14: #{tpu_custom_call.1} parent=1 // pred_check
      _
    $region15: #{tpu_custom_call.1} parent=1 // pred_check_branch
      %1987 = sbr.rel (0) target = $region17
    $region16: #{tpu_custom_call.1} parent=1 // pred_region
      %s1989 = ssub.s32 512, 512
      %1990 = vsyncadd [#allocation4], %s1989
      %s1991 = sshll.u32 [#allocation5], 4
      %s1992 = int_to_ptr.vmem [resolvable:$true] %s1991
      %1997 = dma.vmem_to_hbm [thread:$0]  %s1992, 512, %s2, [#allocation4], 128, 128, 8
    $region17: #{tpu_custom_call.1} parent=1 // pred_fallthru
      _
    // Predicated region
    $region18: #{tpu_custom_call.1} parent=1 // pred_check
      _
    $region19: #{tpu_custom_call.1} parent=1 // pred_check_branch
      %1999 = sbr.rel (0) target = $region21
    $region20: #{tpu_custom_call.1} parent=1 // pred_region
      %2000 = dma.done [#allocation4], 512
    $region21: #{tpu_custom_call.1} parent=1 // pred_fallthru
      _
    %2001 = vsyncpa [#allocation3], 1
    %2002 = vsyncpa [#allocation4], 1

</llo_original>
